<compile_context>
chip_gen: v7x
topology: tpu7x:2x2x1
jax: 0.10.0
libtpu: 0.0.40
codegen_flags: <defaults>
</compile_context>

<pallas_src>
import functools
import math

import jax
import jax.numpy as jnp
from jax.experimental import pallas as pl
from jax.experimental.pallas import tpu as pltpu


# --------------------------------------------------------------------------
# small helpers
# --------------------------------------------------------------------------
def _round_up(x, m):
    return (x + m - 1) // m * m


def _pick_div(n, cands):
    for c in cands:
        if n % c == 0:
            return c
    return n


def _pick_rows(Mp, C, bytes_per=2, target=1 << 21):
    """Largest row-tile dividing Mp with block size <= ~2 MiB."""
    cap = max(8, target // (bytes_per * max(int(C), 1)))
    for c in (8192, 4096, 2048, 1024, 512, 256, 128, 64, 32, 16, 8):
        if c <= cap and Mp % c == 0:
            return c
    return 8


# --------------------------------------------------------------------------
# Pallas kernel 1: tiled MXU matmul (bf16 in, f32 acc, bf16 out) with fused
# per-channel sum / sum-of-squares (BatchNorm batch statistics).
#   A: (T, M, K) bf16   B: (T, K, N) bf16  ->  Y: (M, N) bf16  + f32 stats
#   Grid = (M tiles, N tiles, taps T, K tiles); taps + K are the reduction.
# --------------------------------------------------------------------------
def _conv_mm_kernel(a_ref, b_ref, y_ref, s_ref, q_ref, acc_ref):
    t, kk = pl.program_id(2), pl.program_id(3)
    nt, nk = pl.num_programs(2), pl.num_programs(3)

    @pl.when((t == 0) & (kk == 0))
    def _():
        acc_ref[...] = jnp.zeros_like(acc_ref)

    acc_ref[...] += jnp.dot(a_ref[0], b_ref[0],
                            preferred_element_type=jnp.float32)

    # Write the output (bf16) and its column statistics only once, at the
    # last reduction step.
    @pl.when((t == nt - 1) & (kk == nk - 1))
    def _():
        acc = acc_ref[...]
        y_ref[...] = acc.astype(y_ref.dtype)
        row0 = jax.lax.broadcasted_iota(jnp.int32, s_ref.shape, 0) == 0
        s_ref[...] = jnp.where(row0, jnp.sum(acc, axis=0, keepdims=True), 0.0)
        q_ref[...] = jnp.where(row0, jnp.sum(acc * acc, axis=0, keepdims=True),
                               0.0)


def conv_matmul_stats(a, b):
    """a: (T, M, K) bf16, b: (T, K, Np) bf16 with Np % 128 == 0.
    Returns (y (Mp, Np) bf16, colsum partials f32, colsumsq partials f32, M)."""
    T, M, K = a.shape
    Tb, Kb, Np = b.shape
    assert T == Tb and K == Kb and Np % 128 == 0

    Mp = _round_up(M, 8)
    tm = _pick_div(Mp, (512, 256, 128, 64, 32, 16, 8))
    if tm < 64 and Mp >= 1024:            # awkward row counts: pad instead of
        Mp = _round_up(Mp, 512)           # degenerating into 8-row MXU tiles
        tm = 512
    if Mp != M:                           # zero rows are stats-safe
        a = jnp.pad(a, ((0, 0), (0, Mp - M), (0, 0)))

    tk = K if K <= 512 else _pick_div(K, (512, 256, 128))
    tn = _pick_div(Np, (512, 256, 128))
    mt, nt = Mp // tm, Np // tn
    if mt == 1 and nt == 1 and tn >= 256:  # expose >=2 parallel blocks (v7x)
        tn //= 2
        nt = 2
    grid = (mt, nt, T, K // tk)

    y, s, q = pl.pallas_call(
        _conv_mm_kernel,
        out_shape=(jax.ShapeDtypeStruct((Mp, Np), jnp.bfloat16),
                   jax.ShapeDtypeStruct((8 * mt, Np), jnp.float32),
                   jax.ShapeDtypeStruct((8 * mt, Np), jnp.float32)),
        grid_spec=pltpu.PrefetchScalarGridSpec(
            num_scalar_prefetch=0,
            grid=grid,
            in_specs=[pl.BlockSpec((1, tm, tk), lambda i, j, t, k: (t, i, k)),
                      pl.BlockSpec((1, tk, tn), lambda i, j, t, k: (t, k, j))],
            out_specs=(pl.BlockSpec((tm, tn), lambda i, j, t, k: (i, j)),
                       pl.BlockSpec((8, tn), lambda i, j, t, k: (i, j)),
                       pl.BlockSpec((8, tn), lambda i, j, t, k: (i, j))),
            scratch_shapes=[pltpu.VMEM((tm, tn), jnp.float32)]),
        compiler_params=pltpu.CompilerParams(
            dimension_semantics=("parallel", "parallel",
                                 "arbitrary", "arbitrary"),
            vmem_limit_bytes=48 << 20),
    )(a, b)
    return y, s, q, M


# --------------------------------------------------------------------------
# Pallas kernel 2: fused per-channel scale/shift (+ residual) (+ ReLU), bf16.
# --------------------------------------------------------------------------
def _affine_kernel(y_ref, sc_ref, sh_ref, o_ref, *, relu):
    v = y_ref[...].astype(jnp.float32) * sc_ref[...] + sh_ref[...]
    if relu:
        v = jnp.maximum(v, 0.0)
    o_ref[...] = v.astype(o_ref.dtype)


def _affine_res_kernel(y_ref, sc_ref, sh_ref, r_ref, o_ref, *, relu):
    v = (y_ref[...].astype(jnp.float32) * sc_ref[...] + sh_ref[...]
         + r_ref[...].astype(jnp.float32))
    if relu:
        v = jnp.maximum(v, 0.0)
    o_ref[...] = v.astype(o_ref.dtype)


def affine(y, scale, shift, residual=None, relu=False):
    """y: (Mp, C) bf16 with Mp % 8 == 0 (already padded by the matmul)."""
    Mp, C = y.shape
    scale = jnp.asarray(scale, jnp.float32).reshape(1, C)
    shift = jnp.asarray(shift, jnp.float32).reshape(1, C)
    tm = _pick_rows(Mp, C)
    row_spec = pl.BlockSpec((tm, C), lambda i: (i, 0))
    vec_spec = pl.BlockSpec((1, C), lambda i: (0, 0))
    if residual is None:
        kern = functools.partial(_affine_kernel, relu=relu)
        in_specs = [row_spec, vec_spec, vec_spec]
        args = (y, scale, shift)
    else:
        kern = functools.partial(_affine_res_kernel, relu=relu)
        in_specs = [row_spec, vec_spec, vec_spec, row_spec]
        args = (y, scale, shift, residual)
    return pl.pallas_call(
        kern,
        out_shape=jax.ShapeDtypeStruct((Mp, C), jnp.bfloat16),
        grid_spec=pltpu.PrefetchScalarGridSpec(
            num_scalar_prefetch=0, grid=(Mp // tm,),
            in_specs=in_specs, out_specs=row_spec),
        compiler_params=pltpu.CompilerParams(dimension_semantics=("parallel",)),
    )(*args)


# --------------------------------------------------------------------------
# Pallas kernel 3: fused ConvTranspose de-interleave + BN apply + ReLU.
#   y: (M, 8*Cout) with columns ordered (kd, kh, kw, c) -> written directly
#   into the blocked layout (N*D, 2, H, 2, W, 2*Cout); converting that to
#   (N, 2D, 2H, 2W, Cout) afterwards is a pure reshape (no data movement).
# --------------------------------------------------------------------------
def _ups_affine_kernel(y_ref, sc_ref, sh_ref, o_ref):
    v = y_ref[...].astype(jnp.float32) * sc_ref[...] + sh_ref[...]
    v = jnp.maximum(v, 0.0)
    o_ref[...] = v[:, None, :, None, :, :].astype(o_ref.dtype)


def upsample_affine(y, nd, H, W, Cout, scale, shift):
    """y: (nd*H*W, 8*Cout) bf16 -> (nd, 2, H, 2, W, 2*Cout) bf16."""
    a = y.reshape(nd, H, W, 8 * Cout)
    sc = jnp.tile(jnp.asarray(scale, jnp.float32), 2).reshape(1, 1, 1, 2 * Cout)
    sh = jnp.tile(jnp.asarray(shift, jnp.float32), 2).reshape(1, 1, 1, 2 * Cout)
    return pl.pallas_call(
        _ups_affine_kernel,
        out_shape=jax.ShapeDtypeStruct((nd, 2, H, 2, W, 2 * Cout),
                                       jnp.bfloat16),
        grid_spec=pltpu.PrefetchScalarGridSpec(
            num_scalar_prefetch=0, grid=(nd, 4),
            in_specs=[pl.BlockSpec((1, H, W, 2 * Cout),
                                   lambda i, t: (i, 0, 0, t)),
                      pl.BlockSpec((1, 1, 1, 2 * Cout),
                                   lambda i, t: (0, 0, 0, 0)),
                      pl.BlockSpec((1, 1, 1, 2 * Cout),
                                   lambda i, t: (0, 0, 0, 0))],
            out_specs=pl.BlockSpec((1, 1, H, 1, W, 2 * Cout),
                                   lambda i, t: (i, t // 2, 0, t % 2, 0, 0))),
        compiler_params=pltpu.CompilerParams(
            dimension_semantics=("parallel", "parallel")),
    )(a, sc, sh)


# --------------------------------------------------------------------------
# Pallas kernel 4: MaxPool3d(3, 2, 1) as three separable 1-D 3-tap max passes.
# --------------------------------------------------------------------------
def _max3_kernel(a_ref, b_ref, c_ref, o_ref):
    o_ref[...] = jnp.maximum(jnp.maximum(a_ref[...], b_ref[...]), c_ref[...])


def _pool1d_k3s2p1(x, axis):
    shp = x.shape
    size = shp[axis]
    out_size = (size - 1) // 2 + 1
    pad_width = [(0, 0)] * 5
    pad_width[axis] = (1, 1)
    xp = jnp.pad(x, pad_width, constant_values=-jnp.inf)
    slabs = []
    for kk in range(3):
        idx = [slice(None)] * 5
        idx[axis] = slice(kk, kk + 2 * (out_size - 1) + 1, 2)
        slabs.append(xp[tuple(idx)])
    out_shape5 = list(shp)
    out_shape5[axis] = out_size
    C = shp[-1]
    M = math.prod(out_shape5[:-1])
    Mp = _round_up(M, 8)
    flat = [s.reshape(M, C) for s in slabs]
    if Mp != M:
        flat = [jnp.pad(f, ((0, Mp - M), (0, 0))) for f in flat]
    tm = _pick_rows(Mp, C)
    spec = pl.BlockSpec((tm, C), lambda i: (i, 0))
    out = pl.pallas_call(
        _max3_kernel,
        out_shape=jax.ShapeDtypeStruct((Mp, C), jnp.bfloat16),
        grid_spec=pltpu.PrefetchScalarGridSpec(
            num_scalar_prefetch=0, grid=(Mp // tm,),
            in_specs=[spec, spec, spec], out_specs=spec),
        compiler_params=pltpu.CompilerParams(dimension_semantics=("parallel",)),
    )(*flat)
    return out[:M].reshape(out_shape5)


def maxpool3d_k3s2p1(x):
    x = _pool1d_k3s2p1(x, 3)
    x = _pool1d_k3s2p1(x, 2)
    x = _pool1d_k3s2p1(x, 1)
    return x


# --------------------------------------------------------------------------
# Pallas kernel 5: collapsed final head.
#   final_upsample (ConvT k2 s2, no BN/ReLU) followed by the 1x1x1 conv is
#   algebraically one (Cin, 8) matmul; weights padded to 128 lanes.
# --------------------------------------------------------------------------
def _head_kernel(a_ref, w_ref, b_ref, o_ref):
    o_ref[...] = jnp.dot(a_ref[...].astype(jnp.float32), w_ref[...],
                         preferred_element_type=jnp.float32) + b_ref[...]


def head_matmul(a, w, b_scalar):
    M, C = a.shape
    Mp = _round_up(M, 8)
    if Mp != M:
        a = jnp.pad(a, ((0, Mp - M), (0, 0)))
    b = jnp.full((1, 128), b_scalar, jnp.float32)
    tm = _pick_rows(Mp, 128, bytes_per=4)
    out = pl.pallas_call(
        _head_kernel,
        out_shape=jax.ShapeDtypeStruct((Mp, 128), jnp.float32),
        grid_spec=pltpu.PrefetchScalarGridSpec(
            num_scalar_prefetch=0, grid=(Mp // tm,),
            in_specs=[pl.BlockSpec((tm, C), lambda i: (i, 0)),
                      pl.BlockSpec((C, 128), lambda i: (0, 0)),
                      pl.BlockSpec((1, 128), lambda i: (0, 0))],
            out_specs=pl.BlockSpec((tm, 128), lambda i: (i, 0))),
        compiler_params=pltpu.CompilerParams(dimension_semantics=("parallel",)),
    )(a, w, b)
    return out[:M, :8]


# --------------------------------------------------------------------------
# Glue: channels-last patch extraction / conv wrappers (all bf16)
# --------------------------------------------------------------------------
def _extract_patch_list(x, k, stride, pad):
    N, D, H, W, C = x.shape
    xp = jnp.pad(x, ((0, 0), (pad, pad), (pad, pad), (pad, pad), (0, 0)))
    Do = (D + 2 * pad - k) // stride + 1
    Ho = (H + 2 * pad - k) // stride + 1
    Wo = (W + 2 * pad - k) // stride + 1
    pats = []
    for i in range(k):
        for j in range(k):
            for l in range(k):
                pats.append(xp[:, i:i + (Do - 1) * stride + 1:stride,
                               j:j + (Ho - 1) * stride + 1:stride,
                               l:l + (Wo - 1) * stride + 1:stride, :])
    return pats, (Do, Ho, Wo)


def conv3d(x, w, k, stride=1, pad=0):
    """x: (N,D,H,W,C) bf16.  w: (T, K, Cout) bf16 (tap groups along T).
    Returns (y (Mp,Cout) bf16, sum / sumsq partials, out 5D shape, M)."""
    # TODO(synk): replace the tap-slab stack below with spatial-halo blocks
    # (manual DMA / index_map offsets on a single padded tensor) so the 27x
    # activation re-read is served from VMEM instead of HBM.
    N, D, H, W, C = x.shape
    T, K, Cout = w.shape
    if k == 1:
        xs = x[:, ::stride, ::stride, ::stride, :] if stride != 1 else x
        Do, Ho, Wo = xs.shape[1:4]
        M0 = N * Do * Ho * Wo
        A = xs.reshape(1, M0, C)
    else:
        pats, (Do, Ho, Wo) = _extract_patch_list(x, k, stride, pad)
        M0 = N * Do * Ho * Wo
        g = (k ** 3) // T                       # taps folded per K block
        flat = [p.reshape(M0, C) for p in pats]
        if g == 1:
            A = jnp.stack(flat, axis=0)
        else:
            A = jnp.stack([jnp.concatenate(flat[i * g:(i + 1) * g], axis=-1)
                           for i in range(T)], axis=0)
        if A.shape[-1] != K:                    # stem K padding (343 -> 384)
            A = jnp.pad(A, ((0, 0), (0, 0), (0, K - A.shape[-1])))
    y, s, q, M = conv_matmul_stats(A, w)
    return y, s, q, (N, Do, Ho, Wo, Cout), M


def bn_scale_shift(s_part, q_part, count, gamma, beta, eps=1e-5, fold=1):
    """Training-mode BatchNorm scale/shift from fused matmul stats."""
    cs = jnp.sum(s_part, axis=0)
    cq = jnp.sum(q_part, axis=0)
    if fold > 1:                                # conv-transpose tap folding
        cs = cs.reshape(fold, -1).sum(axis=0)
        cq = cq.reshape(fold, -1).sum(axis=0)
    C = gamma.shape[0]
    cs, cq = cs[:C], cq[:C]
    mean = cs / count
    var = jnp.maximum(cq / count - mean * mean, 0.0)
    inv = jax.lax.rsqrt(var + eps)
    scale = gamma * inv
    shift = beta - mean * scale
    return scale, shift


def from_slab(slab, shape5):
    N, Do, Ho, Wo, C = shape5
    M = N * Do * Ho * Wo
    return slab[:M, :C].reshape(N, Do, Ho, Wo, C)


def to_slab(x5, Mp):
    N, D, H, W, C = x5.shape
    M = N * D * H * W
    s = x5.reshape(M, C)
    if Mp != M:
        s = jnp.pad(s, ((0, Mp - M), (0, 0)))
    return s


def conv_bn(x, w, gamma, beta, k, stride, pad, relu=True):
    y, s, q, shp, M = conv3d(x, w, k, stride, pad)
    scale, shift = bn_scale_shift(s, q, float(M), gamma, beta)
    out = affine(y, scale, shift, relu=relu)
    return out, shp, M


def res_block3d(x, p, stride):
    # conv1 -> BN -> ReLU
    h_slab, shp, _ = conv_bn(x, p['conv1'], p['bn1_g'], p['bn1_b'], 3, stride, 1)
    h = from_slab(h_slab, shp)
    # conv2 -> BN (applied fused with residual add + final ReLU below)
    y2, s2, q2, shp2, M2 = conv3d(h, p['conv2'], 3, 1, 1)
    scale2, shift2 = bn_scale_shift(s2, q2, float(M2), p['bn2_g'], p['bn2_b'])
    Mp = y2.shape[0]
    if 'ds' in p:
        ident, _, _ = conv_bn(x, p['ds'], p['ds_g'], p['ds_b'], 1, stride, 0,
                              relu=False)
    else:
        ident = to_slab(x, Mp)
    out = affine(y2, scale2, shift2, residual=ident, relu=True)
    return from_slab(out, shp2)


def dec_stage(x, p):
    """ConvTranspose3d(k=2, s=2) -> BN(training) -> ReLU, with the tap
    de-interleave fused into the affine kernel's output layout."""
    N, D, H, W, Cin = x.shape
    Cout = p['w'].shape[-1] // 8
    A = x.reshape(1, N * D * H * W, Cin)
    y, s, q, M = conv_matmul_stats(A, p['w'])
    scale, shift = bn_scale_shift(s, q, float(8 * M), p['bn_g'], p['bn_b'],
                                  fold=8)
    out6 = upsample_affine(y[:M], N * D, H, W, Cout, scale, shift)
    return out6.reshape(N, D, 2, H, 2, W, 2, Cout).reshape(
        N, 2 * D, 2 * H, 2 * W, Cout)


def final_head(d1, params):
    """final_upsample + final 1x1x1 conv collapsed into one tiny matmul."""
    N, D, H, W, C = d1.shape
    M = N * D * H * W
    out8 = head_matmul(d1.reshape(M, C), params['head_w'], params['head_b'])
    out = out8.reshape(N, D, H, W, 2, 2, 2)
    out = jnp.transpose(out, (0, 1, 4, 2, 5, 3, 6)).reshape(
        N, 2 * D, 2 * H, 2 * W, 1)
    return out


# --------------------------------------------------------------------------
# Parameter initialization: deterministic synthetic weights, pre-reshaped and
# pre-cast to the bf16 matmul layouts ONCE here (not per forward call).
# --------------------------------------------------------------------------
class ParamGen:
    def __init__(self, key):
        self.key = key

    def take(self, shape, scale=0.05):
        self.key, sub = jax.random.split(self.key)
        return scale * jax.random.normal(sub, shape, jnp.float32)


def init_params(key, in_channels=1, out_channels=1, base=128):
    assert out_channels == 1, "final head is specialised to Cout=1"
    pg = ParamGen(key)

    def bn(c):
        return 1.0 + pg.take((c,), 0.1), pg.take((c,), 0.1)

    def conv_w(cin, cout, k):
        w = pg.take((cout, cin, k, k, k))                 # PyTorch layout
        w = jnp.transpose(w, (2, 3, 4, 1, 0)).reshape(k ** 3, cin, cout)
        if k > 1 and k ** 3 * cin <= 512:                 # stem: fold all taps
            K = k ** 3 * cin
            Kp = _round_up(K, 128)
            w = w.reshape(1, K, cout)
            if Kp != K:
                w = jnp.pad(w, ((0, 0), (0, Kp - K), (0, 0)))
        elif k == 3 and cin <= 128:                       # 3 taps per K block
            w = w.reshape(9, 3 * cin, cout)
        return w.astype(jnp.bfloat16)

    def convT_w(cin, cout):
        w = pg.take((cin, cout, 2, 2, 2))                 # PyTorch layout
        w = jnp.transpose(w, (0, 2, 3, 4, 1)).reshape(1, cin, 8 * cout)
        return w.astype(jnp.bfloat16)

    def block(cin, cout, stride):
        p = {'conv1': conv_w(cin, cout, 3), 'conv2': conv_w(cout, cout, 3)}
        p['bn1_g'], p['bn1_b'] = bn(cout)
        p['bn2_g'], p['bn2_b'] = bn(cout)
        if stride != 1 or cin != cout:
            p['ds'] = conv_w(cin, cout, 1)
            p['ds_g'], p['ds_b'] = bn(cout)
        return p

    def dec(cin, cout):
        d = {'w': convT_w(cin, cout)}
        _ = pg.take((cout,))   # ConvTranspose bias: cancelled by training BN
        d['bn_g'], d['bn_b'] = bn(cout)
        return d

    P = {}
    P['enc_conv1'] = conv_w(in_channels, base, 7)
    _ = pg.take((base,))       # enc_conv1 bias: cancelled by training-mode BN
    P['enc_bn1_g'], P['enc_bn1_b'] = bn(base)
    P['enc_layer1'] = [block(base, base, 1), block(base, base, 1)]
    P['enc_layer2'] = [block(base, 2 * base, 2), block(2 * base, 2 * base, 1)]
    P['enc_layer3'] = [block(2 * base, 4 * base, 2), block(4 * base, 4 * base, 1)]
    P['enc_layer4'] = [block(4 * base, 8 * base, 2), block(8 * base, 8 * base, 1)]
    P['dec_layer4'] = dec(8 * base, 4 * base)
    P['dec_block4'] = block(8 * base, 4 * base, 1)
    P['dec_layer3'] = dec(4 * base, 2 * base)
    P['dec_block3'] = block(4 * base, 2 * base, 1)
    P['dec_layer2'] = dec(2 * base, base)
    P['dec_block2'] = block(2 * base, base, 1)
    P['dec_layer1'] = dec(base, base // 2)

    # final_upsample (ConvT k2 s2, bias) + final 1x1x1 conv (weight, bias):
    # no nonlinearity between them -> collapse into one (Cin, 8) matmul.
    up_w = pg.take((base // 2, base // 2, 2, 2, 2))       # (cin,cout,kd,kh,kw)
    up_b = pg.take((base // 2,))
    wf = pg.take((out_channels, base // 2, 1, 1, 1))
    bf_ = pg.take((out_channels,))
    wf_vec = wf[0, :, 0, 0, 0]                            # (base//2,)
    head_w = jnp.einsum('abcde,b->acde', up_w, wf_vec).reshape(base // 2, 8)
    P['head_w'] = jnp.pad(head_w, ((0, 0), (0, 128 - 8))).astype(jnp.float32)
    P['head_b'] = (jnp.dot(wf_vec, up_b) + bf_[0]).astype(jnp.float32)
    return P


# --------------------------------------------------------------------------
# Full forward pass (mirrors ResNetUNet3D.forward)
# --------------------------------------------------------------------------
def resnet_unet3d_forward(params, x_ncdhw):
    x = jnp.transpose(x_ncdhw, (0, 2, 3, 4, 1)).astype(jnp.bfloat16)  # NDHWC

    # ---- encoder stem: conv7 s2 p3 -> BN -> ReLU -> maxpool 3/2/1 ----
    x1_slab, shp1, _ = conv_bn(x, params['enc_conv1'],
                               params['enc_bn1_g'], params['enc_bn1_b'],
                               7, 2, 3)
    x1 = from_slab(x1_slab, shp1)
    x1p = maxpool3d_k3s2p1(x1)

    def run_layer(h, blocks, stride0):
        h = res_block3d(h, blocks[0], stride0)
        for bp in blocks[1:]:
            h = res_block3d(h, bp, 1)
        return h

    x2 = run_layer(x1p, params['enc_layer1'], 1)
    x3 = run_layer(x2, params['enc_layer2'], 2)
    x4 = run_layer(x3, params['enc_layer3'], 2)
    x5 = run_layer(x4, params['enc_layer4'], 2)

    # ---- decoder ----
    # TODO(synk): split the decoder conv1 / downsample weights along Cin and
    # feed the skip + upsample slabs as two matmul operands to avoid
    # materializing the channel concat.
    d4 = dec_stage(x5, params['dec_layer4'])
    d4 = res_block3d(jnp.concatenate([d4, x4], axis=-1), params['dec_block4'], 1)
    d3 = dec_stage(d4, params['dec_layer3'])
    d3 = res_block3d(jnp.concatenate([d3, x3], axis=-1), params['dec_block3'], 1)
    d2 = dec_stage(d3, params['dec_layer2'])
    d2 = res_block3d(jnp.concatenate([d2, x2], axis=-1), params['dec_block2'], 1)
    d1 = dec_stage(d2, params['dec_layer1'])

    out = final_head(d1, params)                  # f32, NDHWC with C=1
    return jnp.transpose(out, (0, 4, 1, 2, 3))    # NDHWC -> NCDHW


# --------------------------------------------------------------------------
if __name__ == "__main__":
    key = jax.random.PRNGKey(0)
    pkey, xkey = jax.random.split(key)

    # Smallest spatial size for which all U-Net skip shapes line up is 32^3.
    x = jax.random.normal(xkey, (1, 1, 32, 32, 32), jnp.float32)   # NCDHW
    params = init_params(pkey, in_channels=1, out_channels=1, base=128)

    out = resnet_unet3d_forward(params, x)
    out = jax.block_until_ready(out)

    assert out.shape == (1, 1, 32, 32, 32), out.shape
    assert out.dtype == jnp.float32
    assert bool(jnp.all(jnp.isfinite(out)))
    print("KERNEL_OK")
</pallas_src>

<mosaic_0001>
module attributes {stable_mosaic.version = 11 : i64} {
  func.func @_conv_mm_kernel(%arg0: i32, %arg1: i32, %arg2: i32, %arg3: i32, %arg4: memref<1x512x384xbf16, #tpu.memory_space<vmem>>, %arg5: memref<1x384x128xbf16, #tpu.memory_space<vmem>>, %arg6: memref<512x128xbf16, #tpu.memory_space<vmem>>, %arg7: memref<8x128xf32, #tpu.memory_space<vmem>>, %arg8: memref<8x128xf32, #tpu.memory_space<vmem>>, %arg9: memref<512x128xf32, #tpu.memory_space<vmem>>) attributes {dimension_semantics = [#tpu.dimension_semantics<parallel>, #tpu.dimension_semantics<parallel>, #tpu.dimension_semantics<arbitrary>, #tpu.dimension_semantics<arbitrary>], iteration_bounds = array<i64: 8, 1, 1, 1>, scalar_prefetch = 0 : i64, scratch_operands = 1 : i64, tpu.core_type = #tpu.core_type<tc>, window_params = [{transform_indices = @transform_0, window_bounds = array<i64: 1, 512, 384>}, {transform_indices = @transform_1, window_bounds = array<i64: 1, 384, 128>}, {transform_indices = @transform_2, window_bounds = array<i64: 512, 128>}, {transform_indices = @transform_3, window_bounds = array<i64: 8, 128>}, {transform_indices = @transform_4, window_bounds = array<i64: 8, 128>}]} {
    %c0_i32 = arith.constant 0 : i32
    %0 = arith.cmpi eq, %arg2, %c0_i32 : i32
    %c0_i32_0 = arith.constant 0 : i32
    %1 = arith.cmpi eq, %arg3, %c0_i32_0 : i32
    %2 = arith.andi %0, %1 : i1
    %3 = arith.extui %2 : i1 to i32
    %c0_i32_1 = arith.constant 0 : i32
    %4 = arith.cmpi ne, %3, %c0_i32_1 : i32
    scf.if %4 {
      %cst_14 = arith.constant 0.000000e+00 : f32
      %18 = vector.broadcast %cst_14 : f32 to vector<512x128xf32>
      %c0_15 = arith.constant 0 : index
      %c0_16 = arith.constant 0 : index
      %19 = vector.load %arg9[%c0_15, %c0_16] : memref<512x128xf32, #tpu.memory_space<vmem>>, vector<512x128xf32>
      tpu.vector_store %arg9[%c0_15, %c0_16], %18 {strides = array<i32>} : memref<512x128xf32, #tpu.memory_space<vmem>>, vector<512x128xf32>,
    } else {
    }
    %c0 = arith.constant 0 : index
    %c0_2 = arith.constant 0 : index
    %5 = vector.load %arg9[%c0, %c0_2] : memref<512x128xf32, #tpu.memory_space<vmem>>, vector<512x128xf32>
    %c0_3 = arith.constant 0 : index
    %c0_4 = arith.constant 0 : index
    %c0_5 = arith.constant 0 : index
    %6 = vector.load %arg4[%c0_3, %c0_4, %c0_5] : memref<1x512x384xbf16, #tpu.memory_space<vmem>>, vector<1x512x384xbf16>
    %7 = vector.shape_cast %6 : vector<1x512x384xbf16> to vector<512x384xbf16>
    %c0_6 = arith.constant 0 : index
    %c0_7 = arith.constant 0 : index
    %c0_8 = arith.constant 0 : index
    %8 = vector.load %arg5[%c0_6, %c0_7, %c0_8] : memref<1x384x128xbf16, #tpu.memory_space<vmem>>, vector<1x384x128xbf16>
    %9 = vector.shape_cast %8 : vector<1x384x128xbf16> to vector<384x128xbf16>
    %cst = arith.constant dense<0.000000e+00> : vector<512x128xf32>
    %10 = tpu.matmul %7, %9, %cst {dimension_numbers = #tpu.dot_dimension_numbers<[1], [0], [0], [1], [0, 0, 1, 1], [], []>} : vector<512x384xbf16>, vector<384x128xbf16>, vector<512x128xf32> -> vector<512x128xf32>
    %11 = arith.addf %5, %10 : vector<512x128xf32>
    %c0_9 = arith.constant 0 : index
    %c0_10 = arith.constant 0 : index
    %12 = vector.load %arg9[%c0_9, %c0_10] : memref<512x128xf32, #tpu.memory_space<vmem>>, vector<512x128xf32>
    tpu.vector_store %arg9[%c0_9, %c0_10], %11 {strides = array<i32>} : memref<512x128xf32, #tpu.memory_space<vmem>>, vector<512x128xf32>,
    %c0_i32_11 = arith.constant 0 : i32
    %13 = arith.cmpi eq, %arg2, %c0_i32_11 : i32
    %c0_i32_12 = arith.constant 0 : i32
    %14 = arith.cmpi eq, %arg3, %c0_i32_12 : i32
    %15 = arith.andi %13, %14 : i1
    %16 = arith.extui %15 : i1 to i32
    %c0_i32_13 = arith.constant 0 : i32
    %17 = arith.cmpi ne, %16, %c0_i32_13 : i32
    scf.if %17 {
      %c0_14 = arith.constant 0 : index
      %c0_15 = arith.constant 0 : index
      %18 = vector.load %arg9[%c0_14, %c0_15] : memref<512x128xf32, #tpu.memory_space<vmem>>, vector<512x128xf32>
      %19 = arith.truncf %18 : vector<512x128xf32> to vector<512x128xbf16>
      %c0_16 = arith.constant 0 : index
      %c0_17 = arith.constant 0 : index
      %20 = vector.load %arg6[%c0_16, %c0_17] : memref<512x128xbf16, #tpu.memory_space<vmem>>, vector<512x128xbf16>
      tpu.vector_store %arg6[%c0_16, %c0_17], %19 {strides = array<i32>} : memref<512x128xbf16, #tpu.memory_space<vmem>>, vector<512x128xbf16>,
      %21 = tpu.iota {dimensions = array<i32: 0>} : vector<8x128xi32>
      %c0_i32_18 = arith.constant 0 : i32
      %22 = vector.broadcast %c0_i32_18 : i32 to vector<8x128xi32>
      %23 = arith.cmpi eq, %21, %22 : vector<8x128xi32>
      %cst_19 = arith.constant dense<0.000000e+00> : vector<128xf32>
      %24 = vector.multi_reduction <add>, %18, %cst_19 [0] : vector<512x128xf32> to vector<128xf32>
      %25 = vector.shape_cast %24 : vector<128xf32> to vector<1x128xf32>
      %cst_20 = arith.constant 0.000000e+00 : f32
      %26 = vector.shape_cast %25 : vector<1x128xf32> to vector<1x128xf32>
      %27 = vector.broadcast %26 : vector<1x128xf32> to vector<8x128xf32>
      %28 = vector.broadcast %cst_20 : f32 to vector<8x128xf32>
      %29 = arith.select %23, %27, %28 : vector<8x128xi1>, vector<8x128xf32>
      %c0_21 = arith.constant 0 : index
      %c0_22 = arith.constant 0 : index
      %30 = vector.load %arg7[%c0_21, %c0_22] : memref<8x128xf32, #tpu.memory_space<vmem>>, vector<8x128xf32>
      tpu.vector_store %arg7[%c0_21, %c0_22], %29 {strides = array<i32>} : memref<8x128xf32, #tpu.memory_space<vmem>>, vector<8x128xf32>,
      %31 = arith.mulf %18, %18 : vector<512x128xf32>
      %cst_23 = arith.constant dense<0.000000e+00> : vector<128xf32>
      %32 = vector.multi_reduction <add>, %31, %cst_23 [0] : vector<512x128xf32> to vector<128xf32>
      %33 = vector.shape_cast %32 : vector<128xf32> to vector<1x128xf32>
      %cst_24 = arith.constant 0.000000e+00 : f32
      %34 = vector.shape_cast %33 : vector<1x128xf32> to vector<1x128xf32>
      %35 = vector.broadcast %34 : vector<1x128xf32> to vector<8x128xf32>
      %36 = vector.broadcast %cst_24 : f32 to vector<8x128xf32>
      %37 = arith.select %23, %35, %36 : vector<8x128xi1>, vector<8x128xf32>
      %c0_25 = arith.constant 0 : index
      %c0_26 = arith.constant 0 : index
      %38 = vector.load %arg8[%c0_25, %c0_26] : memref<8x128xf32, #tpu.memory_space<vmem>>, vector<8x128xf32>
      tpu.vector_store %arg8[%c0_25, %c0_26], %37 {strides = array<i32>} : memref<8x128xf32, #tpu.memory_space<vmem>>, vector<8x128xf32>,
    } else {
    }
    return
  }
  func.func @transform_0(%arg0: i32, %arg1: i32, %arg2: i32, %arg3: i32) -> (i32, i32, i32) {
    %c0_i32 = arith.constant 0 : i32
    return %arg2, %arg0, %arg3 : i32, i32, i32
  }
  func.func @transform_1(%arg0: i32, %arg1: i32, %arg2: i32, %arg3: i32) -> (i32, i32, i32) {
    %c0_i32 = arith.constant 0 : i32
    return %arg2, %arg3, %arg1 : i32, i32, i32
  }
  func.func @transform_2(%arg0: i32, %arg1: i32, %arg2: i32, %arg3: i32) -> (i32, i32) {
    %c0_i32 = arith.constant 0 : i32
    return %arg0, %arg1 : i32, i32
  }
  func.func @transform_3(%arg0: i32, %arg1: i32, %arg2: i32, %arg3: i32) -> (i32, i32) {
    %c0_i32 = arith.constant 0 : i32
    return %arg0, %arg1 : i32, i32
  }
  func.func @transform_4(%arg0: i32, %arg1: i32, %arg2: i32, %arg3: i32) -> (i32, i32) {
    %c0_i32 = arith.constant 0 : i32
    return %arg0, %arg1 : i32, i32
  }
}

</mosaic_0001>

<llo_original>
// kernel: tpu_custom_call.1
$region0: #{tpu_custom_call.1}
  #allocation0 [shape = 'u32[]', space=smem, size = 0x4, offset = 0x4, fixed_abs, tag = 'smem constant byte address 0x4 - core index']
  #allocation1 [shape = 'u32[144,128]{1,0:T(1,128)}', space=vmem, size = 0x12000, scoped, tag = 'internal scratch']
  #allocation2 [shape = 'f32[512,128]{1,0:T(8,128)}', space=vmem, size = 0x40000, scoped, tag = 'scratch operand']
  %s0 = inlined_call_operand.hbm [shape: bf16[1,4096,384], index: 0, kind: input, shape index: {}]
  %s1 = inlined_call_operand.hbm [shape: bf16[1,384,128], index: 1, kind: input, shape index: {}]
  %s2 = inlined_call_operand.hbm [shape: bf16[4096,128], index: 2, kind: output, shape index: {0}]
  %s3 = inlined_call_operand.hbm [shape: f32[64,128], index: 3, kind: output, shape index: {1}]
  %s4 = inlined_call_operand.hbm [shape: f32[64,128], index: 4, kind: output, shape index: {2}]
  %5 = xla_tuple %s2, %s3, %s4
  %s6 = sld [smem:[#allocation0]]
  $region73: #{tpu_custom_call.1} parent=0
    _
  %s8 = ssub.s32 1, %s6
  %s9 = scalar_select 0, %s8, %s6
  $region1: #{tpu_custom_call.1} parent=0
    #allocation3 [shape = 'u8[786432]{0}', space=vmem, size = 0xc0000, scoped, tag = 'input window, operand 0']
    #allocation4 [shape = 's32[2]{0}', space=sflag, size = 0x8, scoped, tag = 'scoped memory for tpu_custom_call.1']
    #allocation5 [shape = 's32[2]{0}', space=sflag, size = 0x8, scoped, tag = 'scoped memory for tpu_custom_call.1']
    #allocation6 [shape = 'u8[98304]{0}', space=vmem, size = 0x18000, scoped, tag = 'input window, operand 1, single buffered']
    #allocation7 [shape = 's32[1]{0}', space=sflag, size = 0x4, scoped, tag = 'scoped memory for tpu_custom_call.1']
    #allocation8 [shape = 'u8[262144]{0}', space=vmem, size = 0x40000, scoped, tag = 'output window, operand 0']
    #allocation9 [shape = 'u8[8192]{0}', space=vmem, size = 0x2000, scoped, tag = 'output window, operand 1']
    #allocation10 [shape = 's32[2]{0}', space=sflag, size = 0x8, scoped, tag = 'scoped memory for tpu_custom_call.1']
    #allocation11 [shape = 'u8[8192]{0}', space=vmem, size = 0x2000, scoped, tag = 'output window, operand 2']
    %10 = vsyncpa [#allocation4], 0
    %s11 = scalar_lea.sflag [#allocation4], 1
    %12 = vsyncpa %s11, 0
    %13 = vsyncpa [#allocation7], 0
    %14 = vsyncpa [#allocation5], 0
    %s15 = scalar_lea.sflag [#allocation5], 1
    %16 = vsyncpa %s15, 0
    %17 = vsyncpa [#allocation10], 0
    %s18 = scalar_lea.sflag [#allocation10], 1
    %19 = vsyncpa %s18, 0
    loop: start=0, step=1, limit=10
    $region2: #{tpu_custom_call.1} parent=1 // loop_pre_header
      _
    $region3: #{tpu_custom_call.1} parent=1 // loop_header
      %s21 = sphi 0, %s25
      %p22 = scmp.ge.s32.totalorder %s21, 10
      %s28 = sphi 0, %s54
      %s29 = sphi 0, %s50
      %s30 = sphi 0, %s46
      %s31 = sphi 0, %s42
      %s32 = sphi 0, %s28
      %s33 = sphi 0, %s29
      %s34 = sphi 0, %s30
      %s35 = sphi 0, %s31
      %s36 = sphi 0, %s32
      %s37 = sphi 0, %s33
      %s38 = sphi 0, %s34
      %s39 = sphi 0, %s35
      %s61 = sphi 0, %s63
      %s64 = sphi 0, %s61
      %s65 = sphi 0, %s64
      %s81 = sphi 0, %s65
      %s91 = sphi 0, %s93
      %s94 = sphi 0, %s91
      %s95 = sphi 0, %s94
      %s111 = sphi 0, %s95
      %s119 = sphi 0, %s121
      %s122 = sphi 0, %s119
      %s123 = sphi 0, %s122
      %s139 = sphi 0, %s123
      %s147 = sphi 0, %s149
      %s150 = sphi 0, %s147
      %s151 = sphi 0, %s150
      %s167 = sphi 0, %s151
      %s175 = sphi 0, %s177
      %s178 = sphi 0, %s175
      %s179 = sphi 0, %s178
      %s195 = sphi 0, %s179
    $region4: #{tpu_custom_call.1} parent=1 // loop_header_branch
      %24 = sbr.rel (%p22) target = $region8
    $region5: #{tpu_custom_call.1} parent=1 // loop_body
      %s26 = ssub.s32 %s21, 1
      %s27 = ssub.s32 %s21, 2
      %s40 = sadd.s32 1, %s31
      %p41 = scmp.ge.s32.totalorder %s40, 1
      %s42 = scalar_select %p41, 0, %s40
      %s43 = sadd.s32 1, %s30
      %s44 = scalar_select %p41, %s43, %s30
      %p45 = scmp.ge.s32.totalorder %s44, 1
      %s46 = scalar_select %p45, 0, %s44
      %s47 = sadd.s32 1, %s29
      %s48 = scalar_select %p45, %s47, %s29
      %p49 = scmp.ge.s32.totalorder %s48, 1
      %s50 = scalar_select %p49, 0, %s48
      %s51 = sadd.s32 1, %s28
      %s52 = scalar_select %p49, %s51, %s28
      %p53 = scmp.ge.s32.totalorder %s52, 8
      %s54 = scalar_select %p53, 0, %s52
      %s55 = ssub.s32 %s30, %s46
      %s56 = ssub.s32 %s28, %s54
      %s57 = sor.u32 %s55, %s56
      %s58 = ssub.s32 %s31, %s42
      %s59 = sor.u32 %s57, %s58
      %p60 = scmp.eq.s32.totalorder %s59, 0
      %s62 = sadd.s32 %s61, 1
      %s63 = scalar_select %p60, %s61, %s62
      %p66 = pneg %p60
      %p67 = scmp.eq.s32.totalorder %s21, 7
      %p68 = por %p66, %p67
      %p69 = scmp.ne.s32.totalorder %s61, %s64
      %p70 = scmp.eq.s32.totalorder %s21, 0
      %p71 = por %p69, %p70
      %p72 = scmp.ne.s32.totalorder %s61, %s64
      %p73 = scmp.eq.s32.totalorder %s26, 7
      %p74 = por %p72, %p73
      %p75 = scmp.ne.s32.totalorder %s64, %s65
      %p76 = scmp.eq.s32.totalorder %s26, 0
      %p77 = por %p75, %p76
      %p78 = scmp.ne.s32.totalorder %s64, %s65
      %p79 = scmp.eq.s32.totalorder %s27, 7
      %p80 = por %p78, %p79
      %p82 = scmp.ne.s32.totalorder %s65, %s81
      %p83 = scmp.eq.s32.totalorder %s27, 0
      %p84 = por %p82, %p83
      %s85 = ssub.s32 %s30, %s46
      %s86 = ssub.s32 %s31, %s42
      %s87 = sor.u32 %s85, %s86
      %s88 = ssub.s32 %s29, %s50
      %s89 = sor.u32 %s87, %s88
      %p90 = scmp.eq.s32.totalorder %s89, 0
      %s92 = sadd.s32 %s91, 1
      %s93 = scalar_select %p90, %s91, %s92
      %p96 = pneg %p90
      %p97 = scmp.eq.s32.totalorder %s21, 7
      %p98 = por %p96, %p97
      %p99 = scmp.ne.s32.totalorder %s91, %s94
      %p100 = scmp.eq.s32.totalorder %s21, 0
      %p101 = por %p99, %p100
      %p102 = scmp.ne.s32.totalorder %s91, %s94
      %p103 = scmp.eq.s32.totalorder %s26, 7
      %p104 = por %p102, %p103
      %p105 = scmp.ne.s32.totalorder %s94, %s95
      %p106 = scmp.eq.s32.totalorder %s26, 0
      %p107 = por %p105, %p106
      %p108 = scmp.ne.s32.totalorder %s94, %s95
      %p109 = scmp.eq.s32.totalorder %s27, 7
      %p110 = por %p108, %p109
      %p112 = scmp.ne.s32.totalorder %s95, %s111
      %p113 = scmp.eq.s32.totalorder %s27, 0
      %p114 = por %p112, %p113
      %s115 = ssub.s32 %s28, %s54
      %s116 = ssub.s32 %s29, %s50
      %s117 = sor.u32 %s115, %s116
      %p118 = scmp.eq.s32.totalorder %s117, 0
      %s120 = sadd.s32 %s119, 1
      %s121 = scalar_select %p118, %s119, %s120
      %p124 = pneg %p118
      %p125 = scmp.eq.s32.totalorder %s21, 7
      %p126 = por %p124, %p125
      %p127 = scmp.ne.s32.totalorder %s119, %s122
      %p128 = scmp.eq.s32.totalorder %s21, 0
      %p129 = por %p127, %p128
      %p130 = scmp.ne.s32.totalorder %s119, %s122
      %p131 = scmp.eq.s32.totalorder %s26, 7
      %p132 = por %p130, %p131
      %p133 = scmp.ne.s32.totalorder %s122, %s123
      %p134 = scmp.eq.s32.totalorder %s26, 0
      %p135 = por %p133, %p134
      %p136 = scmp.ne.s32.totalorder %s122, %s123
      %p137 = scmp.eq.s32.totalorder %s27, 7
      %p138 = por %p136, %p137
      %p140 = scmp.ne.s32.totalorder %s123, %s139
      %p141 = scmp.eq.s32.totalorder %s27, 0
      %p142 = por %p140, %p141
      %s143 = ssub.s32 %s28, %s54
      %s144 = ssub.s32 %s29, %s50
      %s145 = sor.u32 %s143, %s144
      %p146 = scmp.eq.s32.totalorder %s145, 0
      %s148 = sadd.s32 %s147, 1
      %s149 = scalar_select %p146, %s147, %s148
      %p152 = pneg %p146
      %p153 = scmp.eq.s32.totalorder %s21, 7
      %p154 = por %p152, %p153
      %p155 = scmp.ne.s32.totalorder %s147, %s150
      %p156 = scmp.eq.s32.totalorder %s21, 0
      %p157 = por %p155, %p156
      %p158 = scmp.ne.s32.totalorder %s147, %s150
      %p159 = scmp.eq.s32.totalorder %s26, 7
      %p160 = por %p158, %p159
      %p161 = scmp.ne.s32.totalorder %s150, %s151
      %p162 = scmp.eq.s32.totalorder %s26, 0
      %p163 = por %p161, %p162
      %p164 = scmp.ne.s32.totalorder %s150, %s151
      %p165 = scmp.eq.s32.totalorder %s27, 7
      %p166 = por %p164, %p165
      %p168 = scmp.ne.s32.totalorder %s151, %s167
      %p169 = scmp.eq.s32.totalorder %s27, 0
      %p170 = por %p168, %p169
      %s171 = ssub.s32 %s28, %s54
      %s172 = ssub.s32 %s29, %s50
      %s173 = sor.u32 %s171, %s172
      %p174 = scmp.eq.s32.totalorder %s173, 0
      %s176 = sadd.s32 %s175, 1
      %s177 = scalar_select %p174, %s175, %s176
      %p180 = pneg %p174
      %p181 = scmp.eq.s32.totalorder %s21, 7
      %p182 = por %p180, %p181
      %p183 = scmp.ne.s32.totalorder %s175, %s178
      %p184 = scmp.eq.s32.totalorder %s21, 0
      %p185 = por %p183, %p184
      %p186 = scmp.ne.s32.totalorder %s175, %s178
      %p187 = scmp.eq.s32.totalorder %s26, 7
      %p188 = por %p186, %p187
      %p189 = scmp.ne.s32.totalorder %s178, %s179
      %p190 = scmp.eq.s32.totalorder %s26, 0
      %p191 = por %p189, %p190
      %p192 = scmp.ne.s32.totalorder %s178, %s179
      %p193 = scmp.eq.s32.totalorder %s27, 7
      %p194 = por %p192, %p193
      %p196 = scmp.ne.s32.totalorder %s179, %s195
      %p197 = scmp.eq.s32.totalorder %s27, 0
      %p198 = por %p196, %p197
      %p199 = scmp.le.s32.totalorder 1, %s21
      %p200 = scmp.lt.s32.totalorder %s21, 9
      %p201 = pnand %p199, %p200
      %p202 = pneg %p201
      // Predicated region
      $region9: #{tpu_custom_call.1} parent=5 // pred_check
        _
      $region10: #{tpu_custom_call.1} parent=5 // pred_check_branch
        %204 = sbr.rel (%p201) target = $region12
      $region11: #{tpu_custom_call.1} parent=5 // pred_region
        %s205 = ssub.s32 %s21, 1
        // Predicated region
        $region13: #{tpu_custom_call.1} parent=11 // pred_check
          %p206 = pneg %p107
        $region14: #{tpu_custom_call.1} parent=11 // pred_check_branch
          %208 = sbr.rel (%p206) target = $region16
        $region15: #{tpu_custom_call.1} parent=11 // pred_region
          %s209 = smul.u32 48, %s35
          %s211 = ssub.s32 3072, 3072
          %212 = vsyncadd [#allocation7], %s211
          %s213 = sadd.s32 %s33, %s209
          %s214 = smul.addr %s34, 48
          %s215 = sadd.s32 %s213, %s214
          %s216 = smul.addr %s215, 64
          %s217 = scalar_lea.hbm %s1, %s216
          %s218 = sshll.u32 [#allocation6], 4
          %s219 = int_to_ptr.vmem [resolvable:$true] %s218
          %224 = dma.hbm_to_vmem [thread:$0]  %s217, 3072, %s219, [#allocation7], 64, 64, 4
        $region16: #{tpu_custom_call.1} parent=11 // pred_fallthru
          _
      $region12: #{tpu_custom_call.1} parent=5 // pred_fallthru
        _
      %p225 = scmp.lt.s32.totalorder %s21, 8
      // Predicated region
      $region17: #{tpu_custom_call.1} parent=5 // pred_check
        %p226 = pneg %p225
      $region18: #{tpu_custom_call.1} parent=5 // pred_check_branch
        %228 = sbr.rel (%p226) target = $region20
      $region19: #{tpu_custom_call.1} parent=5 // pred_region
        // Predicated region
        $region21: #{tpu_custom_call.1} parent=19 // pred_check
          %p229 = pneg %p71
        $region22: #{tpu_custom_call.1} parent=19 // pred_check_branch
          %231 = sbr.rel (%p229) target = $region24
        $region23: #{tpu_custom_call.1} parent=19 // pred_region
          %s232 = sand.u32 %s61, 1
          %s233 = scalar_lea.sflag [#allocation4], %s232
          %s234 = sand.u32 %s61, 1
          %s235 = smul.addr %s234, 768
          %s236 = scalar_lea.vmem [#allocation3], %s235
          %s237 = smul.u32 64, %s28
          %s238 = smul.u32 3, %s31
          %s240 = ssub.s32 12288, 12288
          %241 = vsyncadd %s233, %s240
          %s242 = smul.addr %s237, 3
          %s243 = sadd.s32 %s238, %s242
          %s244 = smul.addr %s30, 1536
          %s245 = sadd.s32 %s243, %s244
          %s246 = smul.addr %s245, 64
          %s247 = scalar_lea.hbm %s0, %s246
          %s248 = sshll.u32 %s236, 4
          %s249 = int_to_ptr.vmem [resolvable:$true] %s248
          %254 = dma.hbm_to_vmem [thread:$0]  %s247, 12288, %s249, %s233, 192, 192, 12
        $region24: #{tpu_custom_call.1} parent=19 // pred_fallthru
          _
      $region20: #{tpu_custom_call.1} parent=5 // pred_fallthru
        _
      %p255 = scmp.le.s32.totalorder 1, %s21
      %p256 = scmp.lt.s32.totalorder %s21, 9
      %p257 = pnand %p255, %p256
      %p258 = pneg %p257
      // Predicated region
      $region25: #{tpu_custom_call.1} parent=5 // pred_check
        _
      $region26: #{tpu_custom_call.1} parent=5 // pred_check_branch
        %260 = sbr.rel (%p257) target = $region28
      $region27: #{tpu_custom_call.1} parent=5 // pred_region
        %s261 = ssub.s32 %s21, 1
        %s262 = sand.u32 %s64, 1
        %s263 = scalar_lea.sflag [#allocation4], %s262
        %s264 = sand.u32 %s64, 1
        %s265 = smul.addr %s264, 768
        %s266 = scalar_lea.vmem [#allocation3], %s265
        // Predicated region
        $region29: #{tpu_custom_call.1} parent=27 // pred_check
          %p267 = pneg %p77
        $region30: #{tpu_custom_call.1} parent=27 // pred_check_branch
          %269 = sbr.rel (%p267) target = $region32
        $region31: #{tpu_custom_call.1} parent=27 // pred_region
          %270 = dma.done %s263, 12288
        $region32: #{tpu_custom_call.1} parent=27 // pred_fallthru
          _
        // Predicated region
        $region33: #{tpu_custom_call.1} parent=27 // pred_check
          %p271 = pneg %p107
        $region34: #{tpu_custom_call.1} parent=27 // pred_check_branch
          %273 = sbr.rel (%p271) target = $region36
        $region35: #{tpu_custom_call.1} parent=27 // pred_region
          %274 = dma.done [#allocation7], 3072
        $region36: #{tpu_custom_call.1} parent=27 // pred_fallthru
          _
        %s275 = sand.u32 %s64, 1
        %s276 = scalar_lea.sflag [#allocation4], %s275
        %s277 = sand.u32 %s64, 1
        %s278 = smul.addr %s277, 768
        %s279 = scalar_lea.vmem [#allocation3], %s278
        %p280 = pneg %p77
        %p281 = pneg %p74
        %p282 = pneg %p107
        %p283 = pneg %p104
        %p284 = pneg %p135
        %p285 = pneg %p132
        %s286 = sand.u32 %s122, 1
        %s287 = scalar_lea.sflag [#allocation5], %s286
        %s288 = sand.u32 %s122, 1
        %s289 = smul.addr %s288, 256
        %s290 = scalar_lea.vmem [#allocation8], %s289
        %p291 = pneg %p163
        %p292 = pneg %p160
        %s293 = sand.u32 %s26, 1
        %s294 = scalar_lea.sflag [#allocation10], %s293
        %s295 = sand.u32 %s150, 1
        %s296 = smul.addr %s295, 8
        %s297 = scalar_lea.vmem [#allocation9], %s296
        %p298 = pneg %p191
        %p299 = pneg %p188
        %s300 = sand.u32 %s26, 1
        %s301 = scalar_lea.sflag [#allocation10], %s300
        %s302 = sand.u32 %s178, 1
        %s303 = smul.addr %s302, 8
        %s304 = scalar_lea.vmem [#allocation11], %s303
        %s305 = smul.u32 64, %s32
        %s306 = smul.u32 3, %s35
        %s307 = smul.u32 48, %s35
        %s308 = smul.u32 64, %s32
        %p310 = scmp.eq.s32.totalorder %s34, 0
        %p311 = scmp.eq.s32.totalorder %s35, 0
        %p312 = pnand %p310, %p311
        %p313 = pneg %p312
        // Predicated region
        $region37: #{tpu_custom_call.1} parent=27 // pred_check
          _
        $region38: #{tpu_custom_call.1} parent=27 // pred_check_branch
          %315 = sbr.rel (%p312) target = $region40
        $region39: #{tpu_custom_call.1} parent=27 // pred_region
          %316 = vst [vmem:[#allocation2] sm:$0xff] 0.0
          %317 = vst [vmem:[#allocation2 + $0x8] sm:$0xff] 0.0
          %318 = vst [vmem:[#allocation2 + $0x10] sm:$0xff] 0.0
          %319 = vst [vmem:[#allocation2 + $0x18] sm:$0xff] 0.0
          %320 = vst [vmem:[#allocation2 + $0x20] sm:$0xff] 0.0
          %321 = vst [vmem:[#allocation2 + $0x28] sm:$0xff] 0.0
          %322 = vst [vmem:[#allocation2 + $0x30] sm:$0xff] 0.0
          %323 = vst [vmem:[#allocation2 + $0x38] sm:$0xff] 0.0
          %324 = vst [vmem:[#allocation2 + $0x40] sm:$0xff] 0.0
          %325 = vst [vmem:[#allocation2 + $0x48] sm:$0xff] 0.0
          %326 = vst [vmem:[#allocation2 + $0x50] sm:$0xff] 0.0
          %327 = vst [vmem:[#allocation2 + $0x58] sm:$0xff] 0.0
          %328 = vst [vmem:[#allocation2 + $0x60] sm:$0xff] 0.0
          %329 = vst [vmem:[#allocation2 + $0x68] sm:$0xff] 0.0
          %330 = vst [vmem:[#allocation2 + $0x70] sm:$0xff] 0.0
          %331 = vst [vmem:[#allocation2 + $0x78] sm:$0xff] 0.0
          %332 = vst [vmem:[#allocation2 + $0x80] sm:$0xff] 0.0
          %333 = vst [vmem:[#allocation2 + $0x88] sm:$0xff] 0.0
          %334 = vst [vmem:[#allocation2 + $0x90] sm:$0xff] 0.0
          %335 = vst [vmem:[#allocation2 + $0x98] sm:$0xff] 0.0
          %336 = vst [vmem:[#allocation2 + $0xa0] sm:$0xff] 0.0
          %337 = vst [vmem:[#allocation2 + $0xa8] sm:$0xff] 0.0
          %338 = vst [vmem:[#allocation2 + $0xb0] sm:$0xff] 0.0
          %339 = vst [vmem:[#allocation2 + $0xb8] sm:$0xff] 0.0
          %340 = vst [vmem:[#allocation2 + $0xc0] sm:$0xff] 0.0
          %341 = vst [vmem:[#allocation2 + $0xc8] sm:$0xff] 0.0
          %342 = vst [vmem:[#allocation2 + $0xd0] sm:$0xff] 0.0
          %343 = vst [vmem:[#allocation2 + $0xd8] sm:$0xff] 0.0
          %344 = vst [vmem:[#allocation2 + $0xe0] sm:$0xff] 0.0
          %345 = vst [vmem:[#allocation2 + $0xe8] sm:$0xff] 0.0
          %346 = vst [vmem:[#allocation2 + $0xf0] sm:$0xff] 0.0
          %347 = vst [vmem:[#allocation2 + $0xf8] sm:$0xff] 0.0
          %348 = vst [vmem:[#allocation2 + $0x100] sm:$0xff] 0.0
          %349 = vst [vmem:[#allocation2 + $0x108] sm:$0xff] 0.0
          %350 = vst [vmem:[#allocation2 + $0x110] sm:$0xff] 0.0
          %351 = vst [vmem:[#allocation2 + $0x118] sm:$0xff] 0.0
          %352 = vst [vmem:[#allocation2 + $0x120] sm:$0xff] 0.0
          %353 = vst [vmem:[#allocation2 + $0x128] sm:$0xff] 0.0
          %354 = vst [vmem:[#allocation2 + $0x130] sm:$0xff] 0.0
          %355 = vst [vmem:[#allocation2 + $0x138] sm:$0xff] 0.0
          %356 = vst [vmem:[#allocation2 + $0x140] sm:$0xff] 0.0
          %357 = vst [vmem:[#allocation2 + $0x148] sm:$0xff] 0.0
          %358 = vst [vmem:[#allocation2 + $0x150] sm:$0xff] 0.0
          %359 = vst [vmem:[#allocation2 + $0x158] sm:$0xff] 0.0
          %360 = vst [vmem:[#allocation2 + $0x160] sm:$0xff] 0.0
          %361 = vst [vmem:[#allocation2 + $0x168] sm:$0xff] 0.0
          %362 = vst [vmem:[#allocation2 + $0x170] sm:$0xff] 0.0
          %363 = vst [vmem:[#allocation2 + $0x178] sm:$0xff] 0.0
          %364 = vst [vmem:[#allocation2 + $0x180] sm:$0xff] 0.0
          %365 = vst [vmem:[#allocation2 + $0x188] sm:$0xff] 0.0
          %366 = vst [vmem:[#allocation2 + $0x190] sm:$0xff] 0.0
          %367 = vst [vmem:[#allocation2 + $0x198] sm:$0xff] 0.0
          %368 = vst [vmem:[#allocation2 + $0x1a0] sm:$0xff] 0.0
          %369 = vst [vmem:[#allocation2 + $0x1a8] sm:$0xff] 0.0
          %370 = vst [vmem:[#allocation2 + $0x1b0] sm:$0xff] 0.0
          %371 = vst [vmem:[#allocation2 + $0x1b8] sm:$0xff] 0.0
          %372 = vst [vmem:[#allocation2 + $0x1c0] sm:$0xff] 0.0
          %373 = vst [vmem:[#allocation2 + $0x1c8] sm:$0xff] 0.0
          %374 = vst [vmem:[#allocation2 + $0x1d0] sm:$0xff] 0.0
          %375 = vst [vmem:[#allocation2 + $0x1d8] sm:$0xff] 0.0
          %376 = vst [vmem:[#allocation2 + $0x1e0] sm:$0xff] 0.0
          %377 = vst [vmem:[#allocation2 + $0x1e8] sm:$0xff] 0.0
          %378 = vst [vmem:[#allocation2 + $0x1f0] sm:$0xff] 0.0
          %379 = vst [vmem:[#allocation2 + $0x1f8] sm:$0xff] 0.0
        $region40: #{tpu_custom_call.1} parent=27 // pred_fallthru
          _
        %v380 = vld [vmem:[#allocation2] sm:$0xff]
        %v381 = vld [vmem:[#allocation2 + $0x8] sm:$0xff]
        %v382 = vld [vmem:[#allocation2 + $0x10] sm:$0xff]
        %v383 = vld [vmem:[#allocation2 + $0x18] sm:$0xff]
        %v384 = vld [vmem:[#allocation2 + $0x20] sm:$0xff]
        %v385 = vld [vmem:[#allocation2 + $0x28] sm:$0xff]
        %v386 = vld [vmem:[#allocation2 + $0x30] sm:$0xff]
        %v387 = vld [vmem:[#allocation2 + $0x38] sm:$0xff]
        %v388 = vld [vmem:[#allocation2 + $0x40] sm:$0xff]
        %v389 = vld [vmem:[#allocation2 + $0x48] sm:$0xff]
        %v390 = vld [vmem:[#allocation2 + $0x50] sm:$0xff]
        %v391 = vld [vmem:[#allocation2 + $0x58] sm:$0xff]
        %v392 = vld [vmem:[#allocation2 + $0x60] sm:$0xff]
        %v393 = vld [vmem:[#allocation2 + $0x68] sm:$0xff]
        %v394 = vld [vmem:[#allocation2 + $0x70] sm:$0xff]
        %v395 = vld [vmem:[#allocation2 + $0x78] sm:$0xff]
        %v396 = vld [vmem:[#allocation2 + $0x80] sm:$0xff]
        %v397 = vld [vmem:[#allocation2 + $0x88] sm:$0xff]
        %v398 = vld [vmem:[#allocation2 + $0x90] sm:$0xff]
        %v399 = vld [vmem:[#allocation2 + $0x98] sm:$0xff]
        %v400 = vld [vmem:[#allocation2 + $0xa0] sm:$0xff]
        %v401 = vld [vmem:[#allocation2 + $0xa8] sm:$0xff]
        %v402 = vld [vmem:[#allocation2 + $0xb0] sm:$0xff]
        %v403 = vld [vmem:[#allocation2 + $0xb8] sm:$0xff]
        %v404 = vld [vmem:[#allocation2 + $0xc0] sm:$0xff]
        %v405 = vld [vmem:[#allocation2 + $0xc8] sm:$0xff]
        %v406 = vld [vmem:[#allocation2 + $0xd0] sm:$0xff]
        %v407 = vld [vmem:[#allocation2 + $0xd8] sm:$0xff]
        %v408 = vld [vmem:[#allocation2 + $0xe0] sm:$0xff]
        %v409 = vld [vmem:[#allocation2 + $0xe8] sm:$0xff]
        %v410 = vld [vmem:[#allocation2 + $0xf0] sm:$0xff]
        %v411 = vld [vmem:[#allocation2 + $0xf8] sm:$0xff]
        %v412 = vld [vmem:[#allocation2 + $0x100] sm:$0xff]
        %v413 = vld [vmem:[#allocation2 + $0x108] sm:$0xff]
        %v414 = vld [vmem:[#allocation2 + $0x110] sm:$0xff]
        %v415 = vld [vmem:[#allocation2 + $0x118] sm:$0xff]
        %v416 = vld [vmem:[#allocation2 + $0x120] sm:$0xff]
        %v417 = vld [vmem:[#allocation2 + $0x128] sm:$0xff]
        %v418 = vld [vmem:[#allocation2 + $0x130] sm:$0xff]
        %v419 = vld [vmem:[#allocation2 + $0x138] sm:$0xff]
        %v420 = vld [vmem:[#allocation2 + $0x140] sm:$0xff]
        %v421 = vld [vmem:[#allocation2 + $0x148] sm:$0xff]
        %v422 = vld [vmem:[#allocation2 + $0x150] sm:$0xff]
        %v423 = vld [vmem:[#allocation2 + $0x158] sm:$0xff]
        %v424 = vld [vmem:[#allocation2 + $0x160] sm:$0xff]
        %v425 = vld [vmem:[#allocation2 + $0x168] sm:$0xff]
        %v426 = vld [vmem:[#allocation2 + $0x170] sm:$0xff]
        %v427 = vld [vmem:[#allocation2 + $0x178] sm:$0xff]
        %v428 = vld [vmem:[#allocation2 + $0x180] sm:$0xff]
        %v429 = vld [vmem:[#allocation2 + $0x188] sm:$0xff]
        %v430 = vld [vmem:[#allocation2 + $0x190] sm:$0xff]
        %v431 = vld [vmem:[#allocation2 + $0x198] sm:$0xff]
        %v432 = vld [vmem:[#allocation2 + $0x1a0] sm:$0xff]
        %v433 = vld [vmem:[#allocation2 + $0x1a8] sm:$0xff]
        %v434 = vld [vmem:[#allocation2 + $0x1b0] sm:$0xff]
        %v435 = vld [vmem:[#allocation2 + $0x1b8] sm:$0xff]
        %v436 = vld [vmem:[#allocation2 + $0x1c0] sm:$0xff]
        %v437 = vld [vmem:[#allocation2 + $0x1c8] sm:$0xff]
        %v438 = vld [vmem:[#allocation2 + $0x1d0] sm:$0xff]
        %v439 = vld [vmem:[#allocation2 + $0x1d8] sm:$0xff]
        %v440 = vld [vmem:[#allocation2 + $0x1e0] sm:$0xff]
        %v441 = vld [vmem:[#allocation2 + $0x1e8] sm:$0xff]
        %v442 = vld [vmem:[#allocation2 + $0x1f0] sm:$0xff]
        %v443 = vld [vmem:[#allocation2 + $0x1f8] sm:$0xff]
        %v444 = vld [vmem:[%s266] sm:$0xff]
        %v445 = vld [vmem:[%s266 + $0x8] sm:$0xf]
        %v446 = vld [vmem:[%s266 + $0xc] sm:$0xff]
        %v447 = vld [vmem:[%s266 + $0x14] sm:$0xf]
        %v448 = vld [vmem:[%s266 + $0x18] sm:$0xff]
        %v449 = vld [vmem:[%s266 + $0x20] sm:$0xf]
        %v450 = vld [vmem:[%s266 + $0x24] sm:$0xff]
        %v451 = vld [vmem:[%s266 + $0x2c] sm:$0xf]
        %v452 = vld [vmem:[%s266 + $0x30] sm:$0xff]
        %v453 = vld [vmem:[%s266 + $0x38] sm:$0xf]
        %v454 = vld [vmem:[%s266 + $0x3c] sm:$0xff]
        %v455 = vld [vmem:[%s266 + $0x44] sm:$0xf]
        %v456 = vld [vmem:[%s266 + $0x48] sm:$0xff]
        %v457 = vld [vmem:[%s266 + $0x50] sm:$0xf]
        %v458 = vld [vmem:[%s266 + $0x54] sm:$0xff]
        %v459 = vld [vmem:[%s266 + $0x5c] sm:$0xf]
        %v460 = vld [vmem:[%s266 + $0x60] sm:$0xff]
        %v461 = vld [vmem:[%s266 + $0x68] sm:$0xf]
        %v462 = vld [vmem:[%s266 + $0x6c] sm:$0xff]
        %v463 = vld [vmem:[%s266 + $0x74] sm:$0xf]
        %v464 = vld [vmem:[%s266 + $0x78] sm:$0xff]
        %v465 = vld [vmem:[%s266 + $0x80] sm:$0xf]
        %v466 = vld [vmem:[%s266 + $0x84] sm:$0xff]
        %v467 = vld [vmem:[%s266 + $0x8c] sm:$0xf]
        %v468 = vld [vmem:[%s266 + $0x90] sm:$0xff]
        %v469 = vld [vmem:[%s266 + $0x98] sm:$0xf]
        %v470 = vld [vmem:[%s266 + $0x9c] sm:$0xff]
        %v471 = vld [vmem:[%s266 + $0xa4] sm:$0xf]
        %v472 = vld [vmem:[%s266 + $0xa8] sm:$0xff]
        %v473 = vld [vmem:[%s266 + $0xb0] sm:$0xf]
        %v474 = vld [vmem:[%s266 + $0xb4] sm:$0xff]
        %v475 = vld [vmem:[%s266 + $0xbc] sm:$0xf]
        %v476 = vld [vmem:[%s266 + $0xc0] sm:$0xff]
        %v477 = vld [vmem:[%s266 + $0xc8] sm:$0xf]
        %v478 = vld [vmem:[%s266 + $0xcc] sm:$0xff]
        %v479 = vld [vmem:[%s266 + $0xd4] sm:$0xf]
        %v480 = vld [vmem:[%s266 + $0xd8] sm:$0xff]
        %v481 = vld [vmem:[%s266 + $0xe0] sm:$0xf]
        %v482 = vld [vmem:[%s266 + $0xe4] sm:$0xff]
        %v483 = vld [vmem:[%s266 + $0xec] sm:$0xf]
        %v484 = vld [vmem:[%s266 + $0xf0] sm:$0xff]
        %v485 = vld [vmem:[%s266 + $0xf8] sm:$0xf]
        %v486 = vld [vmem:[%s266 + $0xfc] sm:$0xff]
        %v487 = vld [vmem:[%s266 + $0x104] sm:$0xf]
        %v488 = vld [vmem:[%s266 + $0x108] sm:$0xff]
        %v489 = vld [vmem:[%s266 + $0x110] sm:$0xf]
        %v490 = vld [vmem:[%s266 + $0x114] sm:$0xff]
        %v491 = vld [vmem:[%s266 + $0x11c] sm:$0xf]
        %v492 = vld [vmem:[%s266 + $0x120] sm:$0xff]
        %v493 = vld [vmem:[%s266 + $0x128] sm:$0xf]
        %v494 = vld [vmem:[%s266 + $0x12c] sm:$0xff]
        %v495 = vld [vmem:[%s266 + $0x134] sm:$0xf]
        %v496 = vld [vmem:[%s266 + $0x138] sm:$0xff]
        %v497 = vld [vmem:[%s266 + $0x140] sm:$0xf]
        %v498 = vld [vmem:[%s266 + $0x144] sm:$0xff]
        %v499 = vld [vmem:[%s266 + $0x14c] sm:$0xf]
        %v500 = vld [vmem:[%s266 + $0x150] sm:$0xff]
        %v501 = vld [vmem:[%s266 + $0x158] sm:$0xf]
        %v502 = vld [vmem:[%s266 + $0x15c] sm:$0xff]
        %v503 = vld [vmem:[%s266 + $0x164] sm:$0xf]
        %v504 = vld [vmem:[%s266 + $0x168] sm:$0xff]
        %v505 = vld [vmem:[%s266 + $0x170] sm:$0xf]
        %v506 = vld [vmem:[%s266 + $0x174] sm:$0xff]
        %v507 = vld [vmem:[%s266 + $0x17c] sm:$0xf]
        %v508 = vld [vmem:[%s266 + $0x180] sm:$0xff]
        %v509 = vld [vmem:[%s266 + $0x188] sm:$0xf]
        %v510 = vld [vmem:[%s266 + $0x18c] sm:$0xff]
        %v511 = vld [vmem:[%s266 + $0x194] sm:$0xf]
        %v512 = vld [vmem:[%s266 + $0x198] sm:$0xff]
        %v513 = vld [vmem:[%s266 + $0x1a0] sm:$0xf]
        %v514 = vld [vmem:[%s266 + $0x1a4] sm:$0xff]
        %v515 = vld [vmem:[%s266 + $0x1ac] sm:$0xf]
        %v516 = vld [vmem:[%s266 + $0x1b0] sm:$0xff]
        %v517 = vld [vmem:[%s266 + $0x1b8] sm:$0xf]
        %v518 = vld [vmem:[%s266 + $0x1bc] sm:$0xff]
        %v519 = vld [vmem:[%s266 + $0x1c4] sm:$0xf]
        %v520 = vld [vmem:[%s266 + $0x1c8] sm:$0xff]
        %v521 = vld [vmem:[%s266 + $0x1d0] sm:$0xf]
        %v522 = vld [vmem:[%s266 + $0x1d4] sm:$0xff]
        %v523 = vld [vmem:[%s266 + $0x1dc] sm:$0xf]
        %v524 = vld [vmem:[%s266 + $0x1e0] sm:$0xff]
        %v525 = vld [vmem:[%s266 + $0x1e8] sm:$0xf]
        %v526 = vld [vmem:[%s266 + $0x1ec] sm:$0xff]
        %v527 = vld [vmem:[%s266 + $0x1f4] sm:$0xf]
        %v528 = vld [vmem:[%s266 + $0x1f8] sm:$0xff]
        %v529 = vld [vmem:[%s266 + $0x200] sm:$0xf]
        %v530 = vld [vmem:[%s266 + $0x204] sm:$0xff]
        %v531 = vld [vmem:[%s266 + $0x20c] sm:$0xf]
        %v532 = vld [vmem:[%s266 + $0x210] sm:$0xff]
        %v533 = vld [vmem:[%s266 + $0x218] sm:$0xf]
        %v534 = vld [vmem:[%s266 + $0x21c] sm:$0xff]
        %v535 = vld [vmem:[%s266 + $0x224] sm:$0xf]
        %v536 = vld [vmem:[%s266 + $0x228] sm:$0xff]
        %v537 = vld [vmem:[%s266 + $0x230] sm:$0xf]
        %v538 = vld [vmem:[%s266 + $0x234] sm:$0xff]
        %v539 = vld [vmem:[%s266 + $0x23c] sm:$0xf]
        %v540 = vld [vmem:[%s266 + $0x240] sm:$0xff]
        %v541 = vld [vmem:[%s266 + $0x248] sm:$0xf]
        %v542 = vld [vmem:[%s266 + $0x24c] sm:$0xff]
        %v543 = vld [vmem:[%s266 + $0x254] sm:$0xf]
        %v544 = vld [vmem:[%s266 + $0x258] sm:$0xff]
        %v545 = vld [vmem:[%s266 + $0x260] sm:$0xf]
        %v546 = vld [vmem:[%s266 + $0x264] sm:$0xff]
        %v547 = vld [vmem:[%s266 + $0x26c] sm:$0xf]
        %v548 = vld [vmem:[%s266 + $0x270] sm:$0xff]
        %v549 = vld [vmem:[%s266 + $0x278] sm:$0xf]
        %v550 = vld [vmem:[%s266 + $0x27c] sm:$0xff]
        %v551 = vld [vmem:[%s266 + $0x284] sm:$0xf]
        %v552 = vld [vmem:[%s266 + $0x288] sm:$0xff]
        %v553 = vld [vmem:[%s266 + $0x290] sm:$0xf]
        %v554 = vld [vmem:[%s266 + $0x294] sm:$0xff]
        %v555 = vld [vmem:[%s266 + $0x29c] sm:$0xf]
        %v556 = vld [vmem:[%s266 + $0x2a0] sm:$0xff]
        %v557 = vld [vmem:[%s266 + $0x2a8] sm:$0xf]
        %v558 = vld [vmem:[%s266 + $0x2ac] sm:$0xff]
        %v559 = vld [vmem:[%s266 + $0x2b4] sm:$0xf]
        %v560 = vld [vmem:[%s266 + $0x2b8] sm:$0xff]
        %v561 = vld [vmem:[%s266 + $0x2c0] sm:$0xf]
        %v562 = vld [vmem:[%s266 + $0x2c4] sm:$0xff]
        %v563 = vld [vmem:[%s266 + $0x2cc] sm:$0xf]
        %v564 = vld [vmem:[%s266 + $0x2d0] sm:$0xff]
        %v565 = vld [vmem:[%s266 + $0x2d8] sm:$0xf]
        %v566 = vld [vmem:[%s266 + $0x2dc] sm:$0xff]
        %v567 = vld [vmem:[%s266 + $0x2e4] sm:$0xf]
        %v568 = vld [vmem:[%s266 + $0x2e8] sm:$0xff]
        %v569 = vld [vmem:[%s266 + $0x2f0] sm:$0xf]
        %v570 = vld [vmem:[%s266 + $0x2f4] sm:$0xff]
        %v571 = vld [vmem:[%s266 + $0x2fc] sm:$0xf]
        %v572 = vld [vmem:[#allocation6] sm:$0xf]
        %v573 = vld [vmem:[#allocation6 + $0x4] sm:$0xf]
        %v574 = vld [vmem:[#allocation6 + $0x8] sm:$0xf]
        %v575 = vld [vmem:[#allocation6 + $0xc] sm:$0xf]
        %v576 = vld [vmem:[#allocation6 + $0x10] sm:$0xf]
        %v577 = vld [vmem:[#allocation6 + $0x14] sm:$0xf]
        %v578 = vld [vmem:[#allocation6 + $0x18] sm:$0xf]
        %v579 = vld [vmem:[#allocation6 + $0x1c] sm:$0xf]
        %v580 = vld [vmem:[#allocation6 + $0x20] sm:$0xf]
        %v581 = vld [vmem:[#allocation6 + $0x24] sm:$0xf]
        %v582 = vld [vmem:[#allocation6 + $0x28] sm:$0xf]
        %v583 = vld [vmem:[#allocation6 + $0x2c] sm:$0xf]
        %v584 = vld [vmem:[#allocation6 + $0x30] sm:$0xf]
        %v585 = vld [vmem:[#allocation6 + $0x34] sm:$0xf]
        %v586 = vld [vmem:[#allocation6 + $0x38] sm:$0xf]
        %v587 = vld [vmem:[#allocation6 + $0x3c] sm:$0xf]
        %v588 = vld [vmem:[#allocation6 + $0x40] sm:$0xf]
        %v589 = vld [vmem:[#allocation6 + $0x44] sm:$0xf]
        %v590 = vld [vmem:[#allocation6 + $0x48] sm:$0xf]
        %v591 = vld [vmem:[#allocation6 + $0x4c] sm:$0xf]
        %v592 = vld [vmem:[#allocation6 + $0x50] sm:$0xf]
        %v593 = vld [vmem:[#allocation6 + $0x54] sm:$0xf]
        %v594 = vld [vmem:[#allocation6 + $0x58] sm:$0xf]
        %v595 = vld [vmem:[#allocation6 + $0x5c] sm:$0xf]
        %v596 = vld [vmem:[#allocation6 + $0x60] sm:$0xf]
        %v597 = vld [vmem:[#allocation6 + $0x64] sm:$0xf]
        %v598 = vld [vmem:[#allocation6 + $0x68] sm:$0xf]
        %v599 = vld [vmem:[#allocation6 + $0x6c] sm:$0xf]
        %v600 = vld [vmem:[#allocation6 + $0x70] sm:$0xf]
        %v601 = vld [vmem:[#allocation6 + $0x74] sm:$0xf]
        %v602 = vld [vmem:[#allocation6 + $0x78] sm:$0xf]
        %v603 = vld [vmem:[#allocation6 + $0x7c] sm:$0xf]
        %v604 = vld [vmem:[#allocation6 + $0x80] sm:$0xf]
        %v605 = vld [vmem:[#allocation6 + $0x84] sm:$0xf]
        %v606 = vld [vmem:[#allocation6 + $0x88] sm:$0xf]
        %v607 = vld [vmem:[#allocation6 + $0x8c] sm:$0xf]
        %v608 = vld [vmem:[#allocation6 + $0x90] sm:$0xf]
        %v609 = vld [vmem:[#allocation6 + $0x94] sm:$0xf]
        %v610 = vld [vmem:[#allocation6 + $0x98] sm:$0xf]
        %v611 = vld [vmem:[#allocation6 + $0x9c] sm:$0xf]
        %v612 = vld [vmem:[#allocation6 + $0xa0] sm:$0xf]
        %v613 = vld [vmem:[#allocation6 + $0xa4] sm:$0xf]
        %v614 = vld [vmem:[#allocation6 + $0xa8] sm:$0xf]
        %v615 = vld [vmem:[#allocation6 + $0xac] sm:$0xf]
        %v616 = vld [vmem:[#allocation6 + $0xb0] sm:$0xf]
        %v617 = vld [vmem:[#allocation6 + $0xb4] sm:$0xf]
        %v618 = vld [vmem:[#allocation6 + $0xb8] sm:$0xf]
        %v619 = vld [vmem:[#allocation6 + $0xbc] sm:$0xf]
        %v748 = vunpack.c.l.b16 %v444
        %v749 = vunpack.c.h.b16 %v444
        %v750 = vunpack.c.l.b16 %v445
        %v751 = vunpack.c.l.b16 %v446
        %v752 = vunpack.c.h.b16 %v446
        %v753 = vunpack.c.l.b16 %v447
        %v754 = vunpack.c.l.b16 %v448
        %v755 = vunpack.c.h.b16 %v448
        %v756 = vunpack.c.l.b16 %v449
        %v757 = vunpack.c.l.b16 %v450
        %v758 = vunpack.c.h.b16 %v450
        %v759 = vunpack.c.l.b16 %v451
        %v760 = vunpack.c.l.b16 %v452
        %v761 = vunpack.c.h.b16 %v452
        %v762 = vunpack.c.l.b16 %v453
        %v763 = vunpack.c.l.b16 %v454
        %v764 = vunpack.c.h.b16 %v454
        %v765 = vunpack.c.l.b16 %v455
        %v766 = vunpack.c.l.b16 %v456
        %v767 = vunpack.c.h.b16 %v456
        %v768 = vunpack.c.l.b16 %v457
        %v769 = vunpack.c.l.b16 %v458
        %v770 = vunpack.c.h.b16 %v458
        %v771 = vunpack.c.l.b16 %v459
        %v772 = vunpack.c.l.b16 %v460
        %v773 = vunpack.c.h.b16 %v460
        %v774 = vunpack.c.l.b16 %v461
        %v775 = vunpack.c.l.b16 %v462
        %v776 = vunpack.c.h.b16 %v462
        %v777 = vunpack.c.l.b16 %v463
        %v778 = vunpack.c.l.b16 %v464
        %v779 = vunpack.c.h.b16 %v464
        %v780 = vunpack.c.l.b16 %v465
        %v781 = vunpack.c.l.b16 %v466
        %v782 = vunpack.c.h.b16 %v466
        %v783 = vunpack.c.l.b16 %v467
        %v784 = vunpack.c.l.b16 %v468
        %v785 = vunpack.c.h.b16 %v468
        %v786 = vunpack.c.l.b16 %v469
        %v787 = vunpack.c.l.b16 %v470
        %v788 = vunpack.c.h.b16 %v470
        %v789 = vunpack.c.l.b16 %v471
        %v790 = vunpack.c.l.b16 %v472
        %v791 = vunpack.c.h.b16 %v472
        %v792 = vunpack.c.l.b16 %v473
        %v793 = vunpack.c.l.b16 %v474
        %v794 = vunpack.c.h.b16 %v474
        %v795 = vunpack.c.l.b16 %v475
        %v796 = vunpack.c.l.b16 %v476
        %v797 = vunpack.c.h.b16 %v476
        %v798 = vunpack.c.l.b16 %v477
        %v799 = vunpack.c.l.b16 %v478
        %v800 = vunpack.c.h.b16 %v478
        %v801 = vunpack.c.l.b16 %v479
        %v802 = vunpack.c.l.b16 %v480
        %v803 = vunpack.c.h.b16 %v480
        %v804 = vunpack.c.l.b16 %v481
        %v805 = vunpack.c.l.b16 %v482
        %v806 = vunpack.c.h.b16 %v482
        %v807 = vunpack.c.l.b16 %v483
        %v808 = vunpack.c.l.b16 %v484
        %v809 = vunpack.c.h.b16 %v484
        %v810 = vunpack.c.l.b16 %v485
        %v811 = vunpack.c.l.b16 %v486
        %v812 = vunpack.c.h.b16 %v486
        %v813 = vunpack.c.l.b16 %v487
        %v814 = vunpack.c.l.b16 %v488
        %v815 = vunpack.c.h.b16 %v488
        %v816 = vunpack.c.l.b16 %v489
        %v817 = vunpack.c.l.b16 %v490
        %v818 = vunpack.c.h.b16 %v490
        %v819 = vunpack.c.l.b16 %v491
        %v820 = vunpack.c.l.b16 %v492
        %v821 = vunpack.c.h.b16 %v492
        %v822 = vunpack.c.l.b16 %v493
        %v823 = vunpack.c.l.b16 %v494
        %v824 = vunpack.c.h.b16 %v494
        %v825 = vunpack.c.l.b16 %v495
        %v826 = vunpack.c.l.b16 %v496
        %v827 = vunpack.c.h.b16 %v496
        %v828 = vunpack.c.l.b16 %v497
        %v829 = vunpack.c.l.b16 %v498
        %v830 = vunpack.c.h.b16 %v498
        %v831 = vunpack.c.l.b16 %v499
        %v832 = vunpack.c.l.b16 %v500
        %v833 = vunpack.c.h.b16 %v500
        %v834 = vunpack.c.l.b16 %v501
        %v835 = vunpack.c.l.b16 %v502
        %v836 = vunpack.c.h.b16 %v502
        %v837 = vunpack.c.l.b16 %v503
        %v838 = vunpack.c.l.b16 %v504
        %v839 = vunpack.c.h.b16 %v504
        %v840 = vunpack.c.l.b16 %v505
        %v841 = vunpack.c.l.b16 %v506
        %v842 = vunpack.c.h.b16 %v506
        %v843 = vunpack.c.l.b16 %v507
        %v844 = vunpack.c.l.b16 %v508
        %v845 = vunpack.c.h.b16 %v508
        %v846 = vunpack.c.l.b16 %v509
        %v847 = vunpack.c.l.b16 %v510
        %v848 = vunpack.c.h.b16 %v510
        %v849 = vunpack.c.l.b16 %v511
        %v850 = vunpack.c.l.b16 %v512
        %v851 = vunpack.c.h.b16 %v512
        %v852 = vunpack.c.l.b16 %v513
        %v853 = vunpack.c.l.b16 %v514
        %v854 = vunpack.c.h.b16 %v514
        %v855 = vunpack.c.l.b16 %v515
        %v856 = vunpack.c.l.b16 %v516
        %v857 = vunpack.c.h.b16 %v516
        %v858 = vunpack.c.l.b16 %v517
        %v859 = vunpack.c.l.b16 %v518
        %v860 = vunpack.c.h.b16 %v518
        %v861 = vunpack.c.l.b16 %v519
        %v862 = vunpack.c.l.b16 %v520
        %v863 = vunpack.c.h.b16 %v520
        %v864 = vunpack.c.l.b16 %v521
        %v865 = vunpack.c.l.b16 %v522
        %v866 = vunpack.c.h.b16 %v522
        %v867 = vunpack.c.l.b16 %v523
        %v868 = vunpack.c.l.b16 %v524
        %v869 = vunpack.c.h.b16 %v524
        %v870 = vunpack.c.l.b16 %v525
        %v871 = vunpack.c.l.b16 %v526
        %v872 = vunpack.c.h.b16 %v526
        %v873 = vunpack.c.l.b16 %v527
        %v874 = vunpack.c.l.b16 %v528
        %v875 = vunpack.c.h.b16 %v528
        %v876 = vunpack.c.l.b16 %v529
        %v877 = vunpack.c.l.b16 %v530
        %v878 = vunpack.c.h.b16 %v530
        %v879 = vunpack.c.l.b16 %v531
        %v880 = vunpack.c.l.b16 %v532
        %v881 = vunpack.c.h.b16 %v532
        %v882 = vunpack.c.l.b16 %v533
        %v883 = vunpack.c.l.b16 %v534
        %v884 = vunpack.c.h.b16 %v534
        %v885 = vunpack.c.l.b16 %v535
        %v886 = vunpack.c.l.b16 %v536
        %v887 = vunpack.c.h.b16 %v536
        %v888 = vunpack.c.l.b16 %v537
        %v889 = vunpack.c.l.b16 %v538
        %v890 = vunpack.c.h.b16 %v538
        %v891 = vunpack.c.l.b16 %v539
        %v892 = vunpack.c.l.b16 %v540
        %v893 = vunpack.c.h.b16 %v540
        %v894 = vunpack.c.l.b16 %v541
        %v895 = vunpack.c.l.b16 %v542
        %v896 = vunpack.c.h.b16 %v542
        %v897 = vunpack.c.l.b16 %v543
        %v898 = vunpack.c.l.b16 %v544
        %v899 = vunpack.c.h.b16 %v544
        %v900 = vunpack.c.l.b16 %v545
        %v901 = vunpack.c.l.b16 %v546
        %v902 = vunpack.c.h.b16 %v546
        %v903 = vunpack.c.l.b16 %v547
        %v904 = vunpack.c.l.b16 %v548
        %v905 = vunpack.c.h.b16 %v548
        %v906 = vunpack.c.l.b16 %v549
        %v907 = vunpack.c.l.b16 %v550
        %v908 = vunpack.c.h.b16 %v550
        %v909 = vunpack.c.l.b16 %v551
        %v910 = vunpack.c.l.b16 %v552
        %v911 = vunpack.c.h.b16 %v552
        %v912 = vunpack.c.l.b16 %v553
        %v913 = vunpack.c.l.b16 %v554
        %v914 = vunpack.c.h.b16 %v554
        %v915 = vunpack.c.l.b16 %v555
        %v916 = vunpack.c.l.b16 %v556
        %v917 = vunpack.c.h.b16 %v556
        %v918 = vunpack.c.l.b16 %v557
        %v919 = vunpack.c.l.b16 %v558
        %v920 = vunpack.c.h.b16 %v558
        %v921 = vunpack.c.l.b16 %v559
        %v922 = vunpack.c.l.b16 %v560
        %v923 = vunpack.c.h.b16 %v560
        %v924 = vunpack.c.l.b16 %v561
        %v925 = vunpack.c.l.b16 %v562
        %v926 = vunpack.c.h.b16 %v562
        %v927 = vunpack.c.l.b16 %v563
        %v928 = vunpack.c.l.b16 %v564
        %v929 = vunpack.c.h.b16 %v564
        %v930 = vunpack.c.l.b16 %v565
        %v931 = vunpack.c.l.b16 %v566
        %v932 = vunpack.c.h.b16 %v566
        %v933 = vunpack.c.l.b16 %v567
        %v934 = vunpack.c.l.b16 %v568
        %v935 = vunpack.c.h.b16 %v568
        %v936 = vunpack.c.l.b16 %v569
        %v937 = vunpack.c.l.b16 %v570
        %v938 = vunpack.c.h.b16 %v570
        %v939 = vunpack.c.l.b16 %v571
        %v940 = vpack.c.b16 %v751, %v748
        %v941 = vpack.c.b16 %v752, %v749
        %v942 = vpack.c.b16 %v753, %v750
        %v943 = vpack.c.b16 %v757, %v754
        %v944 = vpack.c.b16 %v758, %v755
        %v945 = vpack.c.b16 %v759, %v756
        %v946 = vpack.c.b16 %v763, %v760
        %v947 = vpack.c.b16 %v764, %v761
        %v948 = vpack.c.b16 %v765, %v762
        %v949 = vpack.c.b16 %v769, %v766
        %v950 = vpack.c.b16 %v770, %v767
        %v951 = vpack.c.b16 %v771, %v768
        %v952 = vpack.c.b16 %v775, %v772
        %v953 = vpack.c.b16 %v776, %v773
        %v954 = vpack.c.b16 %v777, %v774
        %v955 = vpack.c.b16 %v781, %v778
        %v956 = vpack.c.b16 %v782, %v779
        %v957 = vpack.c.b16 %v783, %v780
        %v958 = vpack.c.b16 %v787, %v784
        %v959 = vpack.c.b16 %v788, %v785
        %v960 = vpack.c.b16 %v789, %v786
        %v961 = vpack.c.b16 %v793, %v790
        %v962 = vpack.c.b16 %v794, %v791
        %v963 = vpack.c.b16 %v795, %v792
        %v964 = vpack.c.b16 %v799, %v796
        %v965 = vpack.c.b16 %v800, %v797
        %v966 = vpack.c.b16 %v801, %v798
        %v967 = vpack.c.b16 %v805, %v802
        %v968 = vpack.c.b16 %v806, %v803
        %v969 = vpack.c.b16 %v807, %v804
        %v970 = vpack.c.b16 %v811, %v808
        %v971 = vpack.c.b16 %v812, %v809
        %v972 = vpack.c.b16 %v813, %v810
        %v973 = vpack.c.b16 %v817, %v814
        %v974 = vpack.c.b16 %v818, %v815
        %v975 = vpack.c.b16 %v819, %v816
        %v976 = vpack.c.b16 %v823, %v820
        %v977 = vpack.c.b16 %v824, %v821
        %v978 = vpack.c.b16 %v825, %v822
        %v979 = vpack.c.b16 %v829, %v826
        %v980 = vpack.c.b16 %v830, %v827
        %v981 = vpack.c.b16 %v831, %v828
        %v982 = vpack.c.b16 %v835, %v832
        %v983 = vpack.c.b16 %v836, %v833
        %v984 = vpack.c.b16 %v837, %v834
        %v985 = vpack.c.b16 %v841, %v838
        %v986 = vpack.c.b16 %v842, %v839
        %v987 = vpack.c.b16 %v843, %v840
        %v988 = vpack.c.b16 %v847, %v844
        %v989 = vpack.c.b16 %v848, %v845
        %v990 = vpack.c.b16 %v849, %v846
        %v991 = vpack.c.b16 %v853, %v850
        %v992 = vpack.c.b16 %v854, %v851
        %v993 = vpack.c.b16 %v855, %v852
        %v994 = vpack.c.b16 %v859, %v856
        %v995 = vpack.c.b16 %v860, %v857
        %v996 = vpack.c.b16 %v861, %v858
        %v997 = vpack.c.b16 %v865, %v862
        %v998 = vpack.c.b16 %v866, %v863
        %v999 = vpack.c.b16 %v867, %v864
        %v1000 = vpack.c.b16 %v871, %v868
        %v1001 = vpack.c.b16 %v872, %v869
        %v1002 = vpack.c.b16 %v873, %v870
        %v1003 = vpack.c.b16 %v877, %v874
        %v1004 = vpack.c.b16 %v878, %v875
        %v1005 = vpack.c.b16 %v879, %v876
        %v1006 = vpack.c.b16 %v883, %v880
        %v1007 = vpack.c.b16 %v884, %v881
        %v1008 = vpack.c.b16 %v885, %v882
        %v1009 = vpack.c.b16 %v889, %v886
        %v1010 = vpack.c.b16 %v890, %v887
        %v1011 = vpack.c.b16 %v891, %v888
        %v1012 = vpack.c.b16 %v895, %v892
        %v1013 = vpack.c.b16 %v896, %v893
        %v1014 = vpack.c.b16 %v897, %v894
        %v1015 = vpack.c.b16 %v901, %v898
        %v1016 = vpack.c.b16 %v902, %v899
        %v1017 = vpack.c.b16 %v903, %v900
        %v1018 = vpack.c.b16 %v907, %v904
        %v1019 = vpack.c.b16 %v908, %v905
        %v1020 = vpack.c.b16 %v909, %v906
        %v1021 = vpack.c.b16 %v913, %v910
        %v1022 = vpack.c.b16 %v914, %v911
        %v1023 = vpack.c.b16 %v915, %v912
        %v1024 = vpack.c.b16 %v919, %v916
        %v1025 = vpack.c.b16 %v920, %v917
        %v1026 = vpack.c.b16 %v921, %v918
        %v1027 = vpack.c.b16 %v925, %v922
        %v1028 = vpack.c.b16 %v926, %v923
        %v1029 = vpack.c.b16 %v927, %v924
        %v1030 = vpack.c.b16 %v931, %v928
        %v1031 = vpack.c.b16 %v932, %v929
        %v1032 = vpack.c.b16 %v933, %v930
        %v1033 = vpack.c.b16 %v937, %v934
        %v1034 = vpack.c.b16 %v938, %v935
        %v1035 = vpack.c.b16 %v939, %v936
        %v1180 = vunpack.c.l.b16 %v572
        %v1181 = vunpack.c.l.b16 %v573
        %v1182 = vunpack.c.l.b16 %v574
        %v1183 = vunpack.c.l.b16 %v575
        %v1184 = vunpack.c.l.b16 %v576
        %v1185 = vunpack.c.l.b16 %v577
        %v1186 = vunpack.c.l.b16 %v578
        %v1187 = vunpack.c.l.b16 %v579
        %v1188 = vunpack.c.l.b16 %v580
        %v1189 = vunpack.c.l.b16 %v581
        %v1190 = vunpack.c.l.b16 %v582
        %v1191 = vunpack.c.l.b16 %v583
        %v1192 = vunpack.c.l.b16 %v584
        %v1193 = vunpack.c.l.b16 %v585
        %v1194 = vunpack.c.l.b16 %v586
        %v1195 = vunpack.c.l.b16 %v587
        %v1196 = vunpack.c.l.b16 %v588
        %v1197 = vunpack.c.l.b16 %v589
        %v1198 = vunpack.c.l.b16 %v590
        %v1199 = vunpack.c.l.b16 %v591
        %v1200 = vunpack.c.l.b16 %v592
        %v1201 = vunpack.c.l.b16 %v593
        %v1202 = vunpack.c.l.b16 %v594
        %v1203 = vunpack.c.l.b16 %v595
        %v1204 = vunpack.c.l.b16 %v596
        %v1205 = vunpack.c.l.b16 %v597
        %v1206 = vunpack.c.l.b16 %v598
        %v1207 = vunpack.c.l.b16 %v599
        %v1208 = vunpack.c.l.b16 %v600
        %v1209 = vunpack.c.l.b16 %v601
        %v1210 = vunpack.c.l.b16 %v602
        %v1211 = vunpack.c.l.b16 %v603
        %v1212 = vunpack.c.l.b16 %v604
        %v1213 = vunpack.c.l.b16 %v605
        %v1214 = vunpack.c.l.b16 %v606
        %v1215 = vunpack.c.l.b16 %v607
        %v1216 = vunpack.c.l.b16 %v608
        %v1217 = vunpack.c.l.b16 %v609
        %v1218 = vunpack.c.l.b16 %v610
        %v1219 = vunpack.c.l.b16 %v611
        %v1220 = vunpack.c.l.b16 %v612
        %v1221 = vunpack.c.l.b16 %v613
        %v1222 = vunpack.c.l.b16 %v614
        %v1223 = vunpack.c.l.b16 %v615
        %v1224 = vunpack.c.l.b16 %v616
        %v1225 = vunpack.c.l.b16 %v617
        %v1226 = vunpack.c.l.b16 %v618
        %v1227 = vunpack.c.l.b16 %v619
        %v1228 = vpack.c.b16 %v1181, %v1180
        %v1229 = vpack.c.b16 %v1183, %v1182
        %v1230 = vpack.c.b16 %v1185, %v1184
        %v1231 = vpack.c.b16 %v1187, %v1186
        %v1232 = vpack.c.b16 %v1189, %v1188
        %v1233 = vpack.c.b16 %v1191, %v1190
        %v1234 = vpack.c.b16 %v1193, %v1192
        %v1235 = vpack.c.b16 %v1195, %v1194
        %v1236 = vpack.c.b16 %v1197, %v1196
        %v1237 = vpack.c.b16 %v1199, %v1198
        %v1238 = vpack.c.b16 %v1201, %v1200
        %v1239 = vpack.c.b16 %v1203, %v1202
        %v1240 = vpack.c.b16 %v1205, %v1204
        %v1241 = vpack.c.b16 %v1207, %v1206
        %v1242 = vpack.c.b16 %v1209, %v1208
        %v1243 = vpack.c.b16 %v1211, %v1210
        %v1244 = vpack.c.b16 %v1213, %v1212
        %v1245 = vpack.c.b16 %v1215, %v1214
        %v1246 = vpack.c.b16 %v1217, %v1216
        %v1247 = vpack.c.b16 %v1219, %v1218
        %v1248 = vpack.c.b16 %v1221, %v1220
        %v1249 = vpack.c.b16 %v1223, %v1222
        %v1250 = vpack.c.b16 %v1225, %v1224
        %v1251 = vpack.c.b16 %v1227, %v1226
        %1276 = vmatprep.subr.bf16.mxu0 0
        %1277 = vmatpush1.bf16.msra.mxu0 %v1228
        %1278 = vmatprep.subr.bf16.mxu0 0
        %1279 = vmatpush1.bf16.msra.mxu0 %v1229
        %1280 = vmatprep.subr.bf16.mxu0 0
        %1281 = vmatpush1.bf16.msra.mxu0 %v1230
        %1282 = vmatprep.subr.bf16.mxu0 0
        %1283 = vmatpush1.bf16.msra.mxu0 %v1231
        %1284 = vmatprep.subr.bf16.mxu0 0
        %1285 = vmatpush1.bf16.msra.mxu0 %v1232
        %1286 = vmatprep.subr.bf16.mxu0 0
        %1287 = vmatpush1.bf16.msra.mxu0 %v1233
        %1288 = vmatprep.subr.bf16.mxu0 0
        %1289 = vmatpush1.bf16.msra.mxu0 %v1234
        %1290 = vmatprep.subr.bf16.mxu0 0
        %1291 = vmatpush1.bf16.msra.mxu0 %v1235
        %1292 = vmatprep.subr.bf16.mxu0 0
        %1293 = vmatpush1.bf16.msra.mxu0 %v1236
        %1294 = vmatprep.subr.bf16.mxu0 0
        %1295 = vmatpush1.bf16.msra.mxu0 %v1237
        %1296 = vmatprep.subr.bf16.mxu0 0
        %1297 = vmatpush1.bf16.msra.mxu0 %v1238
        %1298 = vmatprep.subr.bf16.mxu0 0
        %1299 = vmatpush1.bf16.msra.mxu0 %v1239
        %1300 = vmatprep.subr.bf16.mxu0 0
        %1301 = vmatpush1.bf16.msra.mxu0 %v1240
        %1302 = vmatprep.subr.bf16.mxu0 0
        %1303 = vmatpush1.bf16.msra.mxu0 %v1241
        %1304 = vmatprep.subr.bf16.mxu0 0
        %1305 = vmatpush1.bf16.msra.mxu0 %v1242
        %1306 = vmatprep.subr.bf16.mxu0 0
        %1307 = vmatpush1.bf16.msra.mxu0 %v1243
        %1308 = vmatprep.mubr.bf16.mxu0 %v941
        %1309 = vmatmul.mubr.bf16.gmra.mrb[0].mxu0 %v940
        %v1310 = vpop.f32.mrb[0].mxu0
        %v1311 = vadd.f32 0.0, %v1310
        %v1312 = vpop.f32.mrb[0].mxu0
        %v1313 = vpop.f32.mrb[0].mxu0
        %v1314 = vadd.f32 0.0, %v1313
        %v1315 = vpop.f32.mrb[0].mxu0
        %1316 = vmatprep.mubr.bf16.mxu0 %v944
        %1317 = vmatmul.mubr.bf16.gmra.mrb[0].mxu0 %v943
        %v1318 = vpop.f32.mrb[0].mxu0
        %v1319 = vadd.f32 0.0, %v1318
        %v1320 = vpop.f32.mrb[0].mxu0
        %v1321 = vpop.f32.mrb[0].mxu0
        %v1322 = vadd.f32 0.0, %v1321
        %v1323 = vpop.f32.mrb[0].mxu0
        %1324 = vmatprep.mubr.bf16.mxu0 %v947
        %1325 = vmatmul.mubr.bf16.gmra.mrb[0].mxu0 %v946
        %v1326 = vpop.f32.mrb[0].mxu0
        %v1327 = vadd.f32 0.0, %v1326
        %v1328 = vpop.f32.mrb[0].mxu0
        %v1329 = vpop.f32.mrb[0].mxu0
        %v1330 = vadd.f32 0.0, %v1329
        %v1331 = vpop.f32.mrb[0].mxu0
        %1332 = vmatprep.mubr.bf16.mxu0 %v950
        %1333 = vmatmul.mubr.bf16.gmra.mrb[0].mxu0 %v949
        %v1334 = vpop.f32.mrb[0].mxu0
        %v1335 = vadd.f32 0.0, %v1334
        %v1336 = vpop.f32.mrb[0].mxu0
        %v1337 = vpop.f32.mrb[0].mxu0
        %v1338 = vadd.f32 0.0, %v1337
        %v1339 = vpop.f32.mrb[0].mxu0
        %1340 = vmatprep.mubr.bf16.mxu0 %v953
        %1341 = vmatmul.mubr.bf16.gmra.mrb[0].mxu0 %v952
        %v1342 = vpop.f32.mrb[0].mxu0
        %v1343 = vadd.f32 0.0, %v1342
        %v1344 = vpop.f32.mrb[0].mxu0
        %v1345 = vpop.f32.mrb[0].mxu0
        %v1346 = vadd.f32 0.0, %v1345
        %v1347 = vpop.f32.mrb[0].mxu0
        %1348 = vmatprep.mubr.bf16.mxu0 %v956
        %1349 = vmatmul.mubr.bf16.gmra.mrb[0].mxu0 %v955
        %v1350 = vpop.f32.mrb[0].mxu0
        %v1351 = vadd.f32 0.0, %v1350
        %v1352 = vpop.f32.mrb[0].mxu0
        %v1353 = vpop.f32.mrb[0].mxu0
        %v1354 = vadd.f32 0.0, %v1353
        %v1355 = vpop.f32.mrb[0].mxu0
        %1356 = vmatprep.mubr.bf16.mxu0 %v959
        %1357 = vmatmul.mubr.bf16.gmra.mrb[0].mxu0 %v958
        %v1358 = vpop.f32.mrb[0].mxu0
        %v1359 = vadd.f32 0.0, %v1358
        %v1360 = vpop.f32.mrb[0].mxu0
        %v1361 = vpop.f32.mrb[0].mxu0
        %v1362 = vadd.f32 0.0, %v1361
        %v1363 = vpop.f32.mrb[0].mxu0
        %1364 = vmatprep.mubr.bf16.mxu0 %v962
        %1365 = vmatmul.mubr.bf16.gmra.mrb[0].mxu0 %v961
        %v1366 = vpop.f32.mrb[0].mxu0
        %v1367 = vadd.f32 0.0, %v1366
        %v1368 = vpop.f32.mrb[0].mxu0
        %v1369 = vpop.f32.mrb[0].mxu0
        %v1370 = vadd.f32 0.0, %v1369
        %v1371 = vpop.f32.mrb[0].mxu0
        %1372 = vmatprep.mubr.bf16.mxu0 %v965
        %1373 = vmatmul.mubr.bf16.gmra.mrb[0].mxu0 %v964
        %v1374 = vpop.f32.mrb[0].mxu0
        %v1375 = vadd.f32 0.0, %v1374
        %v1376 = vpop.f32.mrb[0].mxu0
        %v1377 = vpop.f32.mrb[0].mxu0
        %v1378 = vadd.f32 0.0, %v1377
        %v1379 = vpop.f32.mrb[0].mxu0
        %1380 = vmatprep.mubr.bf16.mxu0 %v968
        %1381 = vmatmul.mubr.bf16.gmra.mrb[0].mxu0 %v967
        %v1382 = vpop.f32.mrb[0].mxu0
        %v1383 = vadd.f32 0.0, %v1382
        %v1384 = vpop.f32.mrb[0].mxu0
        %v1385 = vpop.f32.mrb[0].mxu0
        %v1386 = vadd.f32 0.0, %v1385
        %v1387 = vpop.f32.mrb[0].mxu0
        %1388 = vmatprep.mubr.bf16.mxu0 %v971
        %1389 = vmatmul.mubr.bf16.gmra.mrb[0].mxu0 %v970
        %v1390 = vpop.f32.mrb[0].mxu0
        %v1391 = vadd.f32 0.0, %v1390
        %v1392 = vpop.f32.mrb[0].mxu0
        %v1393 = vpop.f32.mrb[0].mxu0
        %v1394 = vadd.f32 0.0, %v1393
        %v1395 = vpop.f32.mrb[0].mxu0
        %1396 = vmatprep.mubr.bf16.mxu0 %v974
        %1397 = vmatmul.mubr.bf16.gmra.mrb[0].mxu0 %v973
        %v1398 = vpop.f32.mrb[0].mxu0
        %v1399 = vadd.f32 0.0, %v1398
        %v1400 = vpop.f32.mrb[0].mxu0
        %v1401 = vpop.f32.mrb[0].mxu0
        %v1402 = vadd.f32 0.0, %v1401
        %v1403 = vpop.f32.mrb[0].mxu0
        %1404 = vmatprep.mubr.bf16.mxu0 %v977
        %1405 = vmatmul.mubr.bf16.gmra.mrb[0].mxu0 %v976
        %v1406 = vpop.f32.mrb[0].mxu0
        %v1407 = vadd.f32 0.0, %v1406
        %v1408 = vpop.f32.mrb[0].mxu0
        %v1409 = vpop.f32.mrb[0].mxu0
        %v1410 = vadd.f32 0.0, %v1409
        %v1411 = vpop.f32.mrb[0].mxu0
        %1412 = vmatprep.mubr.bf16.mxu0 %v980
        %1413 = vmatmul.mubr.bf16.gmra.mrb[0].mxu0 %v979
        %v1414 = vpop.f32.mrb[0].mxu0
        %v1415 = vadd.f32 0.0, %v1414
        %v1416 = vpop.f32.mrb[0].mxu0
        %v1417 = vpop.f32.mrb[0].mxu0
        %v1418 = vadd.f32 0.0, %v1417
        %v1419 = vpop.f32.mrb[0].mxu0
        %1420 = vmatprep.mubr.bf16.mxu0 %v983
        %1421 = vmatmul.mubr.bf16.gmra.mrb[0].mxu0 %v982
        %v1422 = vpop.f32.mrb[0].mxu0
        %v1423 = vadd.f32 0.0, %v1422
        %v1424 = vpop.f32.mrb[0].mxu0
        %v1425 = vpop.f32.mrb[0].mxu0
        %v1426 = vadd.f32 0.0, %v1425
        %v1427 = vpop.f32.mrb[0].mxu0
        %1428 = vmatprep.mubr.bf16.mxu0 %v986
        %1429 = vmatmul.mubr.bf16.gmra.mrb[0].mxu0 %v985
        %v1430 = vpop.f32.mrb[0].mxu0
        %v1431 = vadd.f32 0.0, %v1430
        %v1432 = vpop.f32.mrb[0].mxu0
        %v1433 = vpop.f32.mrb[0].mxu0
        %v1434 = vadd.f32 0.0, %v1433
        %v1435 = vpop.f32.mrb[0].mxu0
        %1436 = vmatprep.mubr.bf16.mxu0 %v989
        %1437 = vmatmul.mubr.bf16.gmra.mrb[0].mxu0 %v988
        %v1438 = vpop.f32.mrb[0].mxu0
        %v1439 = vadd.f32 0.0, %v1438
        %v1440 = vpop.f32.mrb[0].mxu0
        %v1441 = vpop.f32.mrb[0].mxu0
        %v1442 = vadd.f32 0.0, %v1441
        %v1443 = vpop.f32.mrb[0].mxu0
        %1444 = vmatprep.mubr.bf16.mxu0 %v992
        %1445 = vmatmul.mubr.bf16.gmra.mrb[0].mxu0 %v991
        %v1446 = vpop.f32.mrb[0].mxu0
        %v1447 = vadd.f32 0.0, %v1446
        %v1448 = vpop.f32.mrb[0].mxu0
        %v1449 = vpop.f32.mrb[0].mxu0
        %v1450 = vadd.f32 0.0, %v1449
        %v1451 = vpop.f32.mrb[0].mxu0
        %1452 = vmatprep.mubr.bf16.mxu0 %v995
        %1453 = vmatmul.mubr.bf16.gmra.mrb[0].mxu0 %v994
        %v1454 = vpop.f32.mrb[0].mxu0
        %v1455 = vadd.f32 0.0, %v1454
        %v1456 = vpop.f32.mrb[0].mxu0
        %v1457 = vpop.f32.mrb[0].mxu0
        %v1458 = vadd.f32 0.0, %v1457
        %v1459 = vpop.f32.mrb[0].mxu0
        %1460 = vmatprep.mubr.bf16.mxu0 %v998
        %1461 = vmatmul.mubr.bf16.gmra.mrb[0].mxu0 %v997
        %v1462 = vpop.f32.mrb[0].mxu0
        %v1463 = vadd.f32 0.0, %v1462
        %v1464 = vpop.f32.mrb[0].mxu0
        %v1465 = vpop.f32.mrb[0].mxu0
        %v1466 = vadd.f32 0.0, %v1465
        %v1467 = vpop.f32.mrb[0].mxu0
        %1468 = vmatprep.mubr.bf16.mxu0 %v1001
        %1469 = vmatmul.mubr.bf16.gmra.mrb[0].mxu0 %v1000
        %v1470 = vpop.f32.mrb[0].mxu0
        %v1471 = vadd.f32 0.0, %v1470
        %v1472 = vpop.f32.mrb[0].mxu0
        %v1473 = vpop.f32.mrb[0].mxu0
        %v1474 = vadd.f32 0.0, %v1473
        %v1475 = vpop.f32.mrb[0].mxu0
        %1476 = vmatprep.mubr.bf16.mxu0 %v1004
        %1477 = vmatmul.mubr.bf16.gmra.mrb[0].mxu0 %v1003
        %v1478 = vpop.f32.mrb[0].mxu0
        %v1479 = vadd.f32 0.0, %v1478
        %v1480 = vpop.f32.mrb[0].mxu0
        %v1481 = vpop.f32.mrb[0].mxu0
        %v1482 = vadd.f32 0.0, %v1481
        %v1483 = vpop.f32.mrb[0].mxu0
        %1484 = vmatprep.mubr.bf16.mxu0 %v1007
        %1485 = vmatmul.mubr.bf16.gmra.mrb[0].mxu0 %v1006
        %v1486 = vpop.f32.mrb[0].mxu0
        %v1487 = vadd.f32 0.0, %v1486
        %v1488 = vpop.f32.mrb[0].mxu0
        %v1489 = vpop.f32.mrb[0].mxu0
        %v1490 = vadd.f32 0.0, %v1489
        %v1491 = vpop.f32.mrb[0].mxu0
        %1492 = vmatprep.mubr.bf16.mxu0 %v1010
        %1493 = vmatmul.mubr.bf16.gmra.mrb[0].mxu0 %v1009
        %v1494 = vpop.f32.mrb[0].mxu0
        %v1495 = vadd.f32 0.0, %v1494
        %v1496 = vpop.f32.mrb[0].mxu0
        %v1497 = vpop.f32.mrb[0].mxu0
        %v1498 = vadd.f32 0.0, %v1497
        %v1499 = vpop.f32.mrb[0].mxu0
        %1500 = vmatprep.mubr.bf16.mxu0 %v1013
        %1501 = vmatmul.mubr.bf16.gmra.mrb[0].mxu0 %v1012
        %v1502 = vpop.f32.mrb[0].mxu0
        %v1503 = vadd.f32 0.0, %v1502
        %v1504 = vpop.f32.mrb[0].mxu0
        %v1505 = vpop.f32.mrb[0].mxu0
        %v1506 = vadd.f32 0.0, %v1505
        %v1507 = vpop.f32.mrb[0].mxu0
        %1508 = vmatprep.mubr.bf16.mxu0 %v1016
        %1509 = vmatmul.mubr.bf16.gmra.mrb[0].mxu0 %v1015
        %v1510 = vpop.f32.mrb[0].mxu0
        %v1511 = vadd.f32 0.0, %v1510
        %v1512 = vpop.f32.mrb[0].mxu0
        %v1513 = vpop.f32.mrb[0].mxu0
        %v1514 = vadd.f32 0.0, %v1513
        %v1515 = vpop.f32.mrb[0].mxu0
        %1516 = vmatprep.mubr.bf16.mxu0 %v1019
        %1517 = vmatmul.mubr.bf16.gmra.mrb[0].mxu0 %v1018
        %v1518 = vpop.f32.mrb[0].mxu0
        %v1519 = vadd.f32 0.0, %v1518
        %v1520 = vpop.f32.mrb[0].mxu0
        %v1521 = vpop.f32.mrb[0].mxu0
        %v1522 = vadd.f32 0.0, %v1521
        %v1523 = vpop.f32.mrb[0].mxu0
        %1524 = vmatprep.mubr.bf16.mxu0 %v1022
        %1525 = vmatmul.mubr.bf16.gmra.mrb[0].mxu0 %v1021
        %v1526 = vpop.f32.mrb[0].mxu0
        %v1527 = vadd.f32 0.0, %v1526
        %v1528 = vpop.f32.mrb[0].mxu0
        %v1529 = vpop.f32.mrb[0].mxu0
        %v1530 = vadd.f32 0.0, %v1529
        %v1531 = vpop.f32.mrb[0].mxu0
        %1532 = vmatprep.mubr.bf16.mxu0 %v1025
        %1533 = vmatmul.mubr.bf16.gmra.mrb[0].mxu0 %v1024
        %v1534 = vpop.f32.mrb[0].mxu0
        %v1535 = vadd.f32 0.0, %v1534
        %v1536 = vpop.f32.mrb[0].mxu0
        %v1537 = vpop.f32.mrb[0].mxu0
        %v1538 = vadd.f32 0.0, %v1537
        %v1539 = vpop.f32.mrb[0].mxu0
        %1540 = vmatprep.mubr.bf16.mxu0 %v1028
        %1541 = vmatmul.mubr.bf16.gmra.mrb[0].mxu0 %v1027
        %v1542 = vpop.f32.mrb[0].mxu0
        %v1543 = vadd.f32 0.0, %v1542
        %v1544 = vpop.f32.mrb[0].mxu0
        %v1545 = vpop.f32.mrb[0].mxu0
        %v1546 = vadd.f32 0.0, %v1545
        %v1547 = vpop.f32.mrb[0].mxu0
        %1548 = vmatprep.mubr.bf16.mxu0 %v1031
        %1549 = vmatmul.mubr.bf16.gmra.mrb[0].mxu0 %v1030
        %v1550 = vpop.f32.mrb[0].mxu0
        %v1551 = vadd.f32 0.0, %v1550
        %v1552 = vpop.f32.mrb[0].mxu0
        %v1553 = vpop.f32.mrb[0].mxu0
        %v1554 = vadd.f32 0.0, %v1553
        %v1555 = vpop.f32.mrb[0].mxu0
        %1556 = vmatprep.mubr.bf16.mxu0 %v1034
        %1557 = vmatmul.mubr.bf16.gmra.mrb[0].mxu0 %v1033
        %v1558 = vpop.f32.mrb[0].mxu0
        %v1559 = vadd.f32 0.0, %v1558
        %v1560 = vpop.f32.mrb[0].mxu0
        %v1561 = vpop.f32.mrb[0].mxu0
        %v1562 = vadd.f32 0.0, %v1561
        %v1563 = vpop.f32.mrb[0].mxu0
        %1564 = vdwg.mxu0
        %1565 = vmatprep.subr.bf16.mxu0 0
        %1566 = vmatpush1.bf16.msra.mxu0 %v1244
        %1567 = vmatprep.subr.bf16.mxu0 0
        %1568 = vmatpush1.bf16.msra.mxu0 %v1245
        %1569 = vmatprep.subr.bf16.mxu0 0
        %1570 = vmatpush1.bf16.msra.mxu0 %v1246
        %1571 = vmatprep.subr.bf16.mxu0 0
        %1572 = vmatpush1.bf16.msra.mxu0 %v1247
        %1573 = vmatprep.subr.bf16.mxu0 0
        %1574 = vmatpush1.bf16.msra.mxu0 %v1248
        %1575 = vmatprep.subr.bf16.mxu0 0
        %1576 = vmatpush1.bf16.msra.mxu0 %v1249
        %1577 = vmatprep.subr.bf16.mxu0 0
        %1578 = vmatpush1.bf16.msra.mxu0 %v1250
        %1579 = vmatprep.subr.bf16.mxu0 0
        %1580 = vmatpush1.bf16.msra.mxu0 %v1251
        %1581 = vmatprep.subr.bf16.mxu0 0
        %1582 = vmatpush1.bf16.msra.mxu0 0
        %1583 = vmatprep.subr.bf16.mxu0 0
        %1584 = vmatpush1.bf16.msra.mxu0 0
        %1585 = vmatprep.subr.bf16.mxu0 0
        %1586 = vmatpush1.bf16.msra.mxu0 0
        %1587 = vmatprep.subr.bf16.mxu0 0
        %1588 = vmatpush1.bf16.msra.mxu0 0
        %1589 = vmatprep.subr.bf16.mxu0 0
        %1590 = vmatpush1.bf16.msra.mxu0 0
        %1591 = vmatprep.subr.bf16.mxu0 0
        %1592 = vmatpush1.bf16.msra.mxu0 0
        %1593 = vmatprep.subr.bf16.mxu0 0
        %1594 = vmatpush1.bf16.msra.mxu0 0
        %1595 = vmatprep.subr.bf16.mxu0 0
        %1596 = vmatpush1.bf16.msra.mxu0 0
        %1597 = vmatprep.mubr.bf16.mxu0 0
        %1598 = vmatmul.mubr.bf16.gmra.mrb[0].mxu0 %v942
        %v1599 = vpop.f32.mrb[0].mxu0
        %v1600 = vadd.f32 %v1311, %v1599
        %v1601 = vpop.f32.mrb[0].mxu0
        %v1602 = vpop.f32.mrb[0].mxu0
        %v1603 = vadd.f32 %v1314, %v1602
        %v1604 = vpop.f32.mrb[0].mxu0
        %1605 = vmatprep.mubr.bf16.mxu0 0
        %1606 = vmatmul.mubr.bf16.gmra.mrb[0].mxu0 %v945
        %v1607 = vpop.f32.mrb[0].mxu0
        %v1608 = vadd.f32 %v1319, %v1607
        %v1609 = vpop.f32.mrb[0].mxu0
        %v1610 = vpop.f32.mrb[0].mxu0
        %v1611 = vadd.f32 %v1322, %v1610
        %v1612 = vpop.f32.mrb[0].mxu0
        %1613 = vmatprep.mubr.bf16.mxu0 0
        %1614 = vmatmul.mubr.bf16.gmra.mrb[0].mxu0 %v948
        %v1615 = vpop.f32.mrb[0].mxu0
        %v1616 = vadd.f32 %v1327, %v1615
        %v1617 = vpop.f32.mrb[0].mxu0
        %v1618 = vpop.f32.mrb[0].mxu0
        %v1619 = vadd.f32 %v1330, %v1618
        %v1620 = vpop.f32.mrb[0].mxu0
        %1621 = vmatprep.mubr.bf16.mxu0 0
        %1622 = vmatmul.mubr.bf16.gmra.mrb[0].mxu0 %v951
        %v1623 = vpop.f32.mrb[0].mxu0
        %v1624 = vadd.f32 %v1335, %v1623
        %v1625 = vpop.f32.mrb[0].mxu0
        %v1626 = vpop.f32.mrb[0].mxu0
        %v1627 = vadd.f32 %v1338, %v1626
        %v1628 = vpop.f32.mrb[0].mxu0
        %1629 = vmatprep.mubr.bf16.mxu0 0
        %1630 = vmatmul.mubr.bf16.gmra.mrb[0].mxu0 %v954
        %v1631 = vpop.f32.mrb[0].mxu0
        %v1632 = vadd.f32 %v1343, %v1631
        %v1633 = vpop.f32.mrb[0].mxu0
        %v1634 = vpop.f32.mrb[0].mxu0
        %v1635 = vadd.f32 %v1346, %v1634
        %v1636 = vpop.f32.mrb[0].mxu0
        %1637 = vmatprep.mubr.bf16.mxu0 0
        %1638 = vmatmul.mubr.bf16.gmra.mrb[0].mxu0 %v957
        %v1639 = vpop.f32.mrb[0].mxu0
        %v1640 = vadd.f32 %v1351, %v1639
        %v1641 = vpop.f32.mrb[0].mxu0
        %v1642 = vpop.f32.mrb[0].mxu0
        %v1643 = vadd.f32 %v1354, %v1642
        %v1644 = vpop.f32.mrb[0].mxu0
        %1645 = vmatprep.mubr.bf16.mxu0 0
        %1646 = vmatmul.mubr.bf16.gmra.mrb[0].mxu0 %v960
        %v1647 = vpop.f32.mrb[0].mxu0
        %v1648 = vadd.f32 %v1359, %v1647
        %v1649 = vpop.f32.mrb[0].mxu0
        %v1650 = vpop.f32.mrb[0].mxu0
        %v1651 = vadd.f32 %v1362, %v1650
        %v1652 = vpop.f32.mrb[0].mxu0
        %1653 = vmatprep.mubr.bf16.mxu0 0
        %1654 = vmatmul.mubr.bf16.gmra.mrb[0].mxu0 %v963
        %v1655 = vpop.f32.mrb[0].mxu0
        %v1656 = vadd.f32 %v1367, %v1655
        %v1657 = vpop.f32.mrb[0].mxu0
        %v1658 = vpop.f32.mrb[0].mxu0
        %v1659 = vadd.f32 %v1370, %v1658
        %v1660 = vpop.f32.mrb[0].mxu0
        %1661 = vmatprep.mubr.bf16.mxu0 0
        %1662 = vmatmul.mubr.bf16.gmra.mrb[0].mxu0 %v966
        %v1663 = vpop.f32.mrb[0].mxu0
        %v1664 = vadd.f32 %v1375, %v1663
        %v1665 = vpop.f32.mrb[0].mxu0
        %v1666 = vpop.f32.mrb[0].mxu0
        %v1667 = vadd.f32 %v1378, %v1666
        %v1668 = vpop.f32.mrb[0].mxu0
        %1669 = vmatprep.mubr.bf16.mxu0 0
        %1670 = vmatmul.mubr.bf16.gmra.mrb[0].mxu0 %v969
        %v1671 = vpop.f32.mrb[0].mxu0
        %v1672 = vadd.f32 %v1383, %v1671
        %v1673 = vpop.f32.mrb[0].mxu0
        %v1674 = vpop.f32.mrb[0].mxu0
        %v1675 = vadd.f32 %v1386, %v1674
        %v1676 = vpop.f32.mrb[0].mxu0
        %1677 = vmatprep.mubr.bf16.mxu0 0
        %1678 = vmatmul.mubr.bf16.gmra.mrb[0].mxu0 %v972
        %v1679 = vpop.f32.mrb[0].mxu0
        %v1680 = vadd.f32 %v1391, %v1679
        %v1681 = vpop.f32.mrb[0].mxu0
        %v1682 = vpop.f32.mrb[0].mxu0
        %v1683 = vadd.f32 %v1394, %v1682
        %v1684 = vpop.f32.mrb[0].mxu0
        %1685 = vmatprep.mubr.bf16.mxu0 0
        %1686 = vmatmul.mubr.bf16.gmra.mrb[0].mxu0 %v975
        %v1687 = vpop.f32.mrb[0].mxu0
        %v1688 = vadd.f32 %v1399, %v1687
        %v1689 = vpop.f32.mrb[0].mxu0
        %v1690 = vpop.f32.mrb[0].mxu0
        %v1691 = vadd.f32 %v1402, %v1690
        %v1692 = vpop.f32.mrb[0].mxu0
        %1693 = vmatprep.mubr.bf16.mxu0 0
        %1694 = vmatmul.mubr.bf16.gmra.mrb[0].mxu0 %v978
        %v1695 = vpop.f32.mrb[0].mxu0
        %v1696 = vadd.f32 %v1407, %v1695
        %v1697 = vpop.f32.mrb[0].mxu0
        %v1698 = vpop.f32.mrb[0].mxu0
        %v1699 = vadd.f32 %v1410, %v1698
        %v1700 = vpop.f32.mrb[0].mxu0
        %1701 = vmatprep.mubr.bf16.mxu0 0
        %1702 = vmatmul.mubr.bf16.gmra.mrb[0].mxu0 %v981
        %v1703 = vpop.f32.mrb[0].mxu0
        %v1704 = vadd.f32 %v1415, %v1703
        %v1705 = vpop.f32.mrb[0].mxu0
        %v1706 = vpop.f32.mrb[0].mxu0
        %v1707 = vadd.f32 %v1418, %v1706
        %v1708 = vpop.f32.mrb[0].mxu0
        %1709 = vmatprep.mubr.bf16.mxu0 0
        %1710 = vmatmul.mubr.bf16.gmra.mrb[0].mxu0 %v984
        %v1711 = vpop.f32.mrb[0].mxu0
        %v1712 = vadd.f32 %v1423, %v1711
        %v1713 = vpop.f32.mrb[0].mxu0
        %v1714 = vpop.f32.mrb[0].mxu0
        %v1715 = vadd.f32 %v1426, %v1714
        %v1716 = vpop.f32.mrb[0].mxu0
        %1717 = vmatprep.mubr.bf16.mxu0 0
        %1718 = vmatmul.mubr.bf16.gmra.mrb[0].mxu0 %v987
        %v1719 = vpop.f32.mrb[0].mxu0
        %v1720 = vadd.f32 %v1431, %v1719
        %v1721 = vpop.f32.mrb[0].mxu0
        %v1722 = vpop.f32.mrb[0].mxu0
        %v1723 = vadd.f32 %v1434, %v1722
        %v1724 = vpop.f32.mrb[0].mxu0
        %1725 = vmatprep.mubr.bf16.mxu0 0
        %1726 = vmatmul.mubr.bf16.gmra.mrb[0].mxu0 %v990
        %v1727 = vpop.f32.mrb[0].mxu0
        %v1728 = vadd.f32 %v1439, %v1727
        %v1729 = vpop.f32.mrb[0].mxu0
        %v1730 = vpop.f32.mrb[0].mxu0
        %v1731 = vadd.f32 %v1442, %v1730
        %v1732 = vpop.f32.mrb[0].mxu0
        %1733 = vmatprep.mubr.bf16.mxu0 0
        %1734 = vmatmul.mubr.bf16.gmra.mrb[0].mxu0 %v993
        %v1735 = vpop.f32.mrb[0].mxu0
        %v1736 = vadd.f32 %v1447, %v1735
        %v1737 = vpop.f32.mrb[0].mxu0
        %v1738 = vpop.f32.mrb[0].mxu0
        %v1739 = vadd.f32 %v1450, %v1738
        %v1740 = vpop.f32.mrb[0].mxu0
        %1741 = vmatprep.mubr.bf16.mxu0 0
        %1742 = vmatmul.mubr.bf16.gmra.mrb[0].mxu0 %v996
        %v1743 = vpop.f32.mrb[0].mxu0
        %v1744 = vadd.f32 %v1455, %v1743
        %v1745 = vpop.f32.mrb[0].mxu0
        %v1746 = vpop.f32.mrb[0].mxu0
        %v1747 = vadd.f32 %v1458, %v1746
        %v1748 = vpop.f32.mrb[0].mxu0
        %1749 = vmatprep.mubr.bf16.mxu0 0
        %1750 = vmatmul.mubr.bf16.gmra.mrb[0].mxu0 %v999
        %v1751 = vpop.f32.mrb[0].mxu0
        %v1752 = vadd.f32 %v1463, %v1751
        %v1753 = vpop.f32.mrb[0].mxu0
        %v1754 = vpop.f32.mrb[0].mxu0
        %v1755 = vadd.f32 %v1466, %v1754
        %v1756 = vpop.f32.mrb[0].mxu0
        %1757 = vmatprep.mubr.bf16.mxu0 0
        %1758 = vmatmul.mubr.bf16.gmra.mrb[0].mxu0 %v1002
        %v1759 = vpop.f32.mrb[0].mxu0
        %v1760 = vadd.f32 %v1471, %v1759
        %v1761 = vpop.f32.mrb[0].mxu0
        %v1762 = vpop.f32.mrb[0].mxu0
        %v1763 = vadd.f32 %v1474, %v1762
        %v1764 = vpop.f32.mrb[0].mxu0
        %1765 = vmatprep.mubr.bf16.mxu0 0
        %1766 = vmatmul.mubr.bf16.gmra.mrb[0].mxu0 %v1005
        %v1767 = vpop.f32.mrb[0].mxu0
        %v1768 = vadd.f32 %v1479, %v1767
        %v1769 = vpop.f32.mrb[0].mxu0
        %v1770 = vpop.f32.mrb[0].mxu0
        %v1771 = vadd.f32 %v1482, %v1770
        %v1772 = vpop.f32.mrb[0].mxu0
        %1773 = vmatprep.mubr.bf16.mxu0 0
        %1774 = vmatmul.mubr.bf16.gmra.mrb[0].mxu0 %v1008
        %v1775 = vpop.f32.mrb[0].mxu0
        %v1776 = vadd.f32 %v1487, %v1775
        %v1777 = vpop.f32.mrb[0].mxu0
        %v1778 = vpop.f32.mrb[0].mxu0
        %v1779 = vadd.f32 %v1490, %v1778
        %v1780 = vpop.f32.mrb[0].mxu0
        %1781 = vmatprep.mubr.bf16.mxu0 0
        %1782 = vmatmul.mubr.bf16.gmra.mrb[0].mxu0 %v1011
        %v1783 = vpop.f32.mrb[0].mxu0
        %v1784 = vadd.f32 %v1495, %v1783
        %v1785 = vpop.f32.mrb[0].mxu0
        %v1786 = vpop.f32.mrb[0].mxu0
        %v1787 = vadd.f32 %v1498, %v1786
        %v1788 = vpop.f32.mrb[0].mxu0
        %1789 = vmatprep.mubr.bf16.mxu0 0
        %1790 = vmatmul.mubr.bf16.gmra.mrb[0].mxu0 %v1014
        %v1791 = vpop.f32.mrb[0].mxu0
        %v1792 = vadd.f32 %v1503, %v1791
        %v1793 = vpop.f32.mrb[0].mxu0
        %v1794 = vpop.f32.mrb[0].mxu0
        %v1795 = vadd.f32 %v1506, %v1794
        %v1796 = vpop.f32.mrb[0].mxu0
        %1797 = vmatprep.mubr.bf16.mxu0 0
        %1798 = vmatmul.mubr.bf16.gmra.mrb[0].mxu0 %v1017
        %v1799 = vpop.f32.mrb[0].mxu0
        %v1800 = vadd.f32 %v1511, %v1799
        %v1801 = vpop.f32.mrb[0].mxu0
        %v1802 = vpop.f32.mrb[0].mxu0
        %v1803 = vadd.f32 %v1514, %v1802
        %v1804 = vpop.f32.mrb[0].mxu0
        %1805 = vmatprep.mubr.bf16.mxu0 0
        %1806 = vmatmul.mubr.bf16.gmra.mrb[0].mxu0 %v1020
        %v1807 = vpop.f32.mrb[0].mxu0
        %v1808 = vadd.f32 %v1519, %v1807
        %v1809 = vpop.f32.mrb[0].mxu0
        %v1810 = vpop.f32.mrb[0].mxu0
        %v1811 = vadd.f32 %v1522, %v1810
        %v1812 = vpop.f32.mrb[0].mxu0
        %1813 = vmatprep.mubr.bf16.mxu0 0
        %1814 = vmatmul.mubr.bf16.gmra.mrb[0].mxu0 %v1023
        %v1815 = vpop.f32.mrb[0].mxu0
        %v1816 = vadd.f32 %v1527, %v1815
        %v1817 = vpop.f32.mrb[0].mxu0
        %v1818 = vpop.f32.mrb[0].mxu0
        %v1819 = vadd.f32 %v1530, %v1818
        %v1820 = vpop.f32.mrb[0].mxu0
        %1821 = vmatprep.mubr.bf16.mxu0 0
        %1822 = vmatmul.mubr.bf16.gmra.mrb[0].mxu0 %v1026
        %v1823 = vpop.f32.mrb[0].mxu0
        %v1824 = vadd.f32 %v1535, %v1823
        %v1825 = vpop.f32.mrb[0].mxu0
        %v1826 = vpop.f32.mrb[0].mxu0
        %v1827 = vadd.f32 %v1538, %v1826
        %v1828 = vpop.f32.mrb[0].mxu0
        %1829 = vmatprep.mubr.bf16.mxu0 0
        %1830 = vmatmul.mubr.bf16.gmra.mrb[0].mxu0 %v1029
        %v1831 = vpop.f32.mrb[0].mxu0
        %v1832 = vadd.f32 %v1543, %v1831
        %v1833 = vpop.f32.mrb[0].mxu0
        %v1834 = vpop.f32.mrb[0].mxu0
        %v1835 = vadd.f32 %v1546, %v1834
        %v1836 = vpop.f32.mrb[0].mxu0
        %1837 = vmatprep.mubr.bf16.mxu0 0
        %1838 = vmatmul.mubr.bf16.gmra.mrb[0].mxu0 %v1032
        %v1839 = vpop.f32.mrb[0].mxu0
        %v1840 = vadd.f32 %v1551, %v1839
        %v1841 = vpop.f32.mrb[0].mxu0
        %v1842 = vpop.f32.mrb[0].mxu0
        %v1843 = vadd.f32 %v1554, %v1842
        %v1844 = vpop.f32.mrb[0].mxu0
        %1845 = vmatprep.mubr.bf16.mxu0 0
        %1846 = vmatmul.mubr.bf16.gmra.mrb[0].mxu0 %v1035
        %v1847 = vpop.f32.mrb[0].mxu0
        %v1848 = vadd.f32 %v1559, %v1847
        %v1849 = vpop.f32.mrb[0].mxu0
        %v1850 = vpop.f32.mrb[0].mxu0
        %v1851 = vadd.f32 %v1562, %v1850
        %v1852 = vpop.f32.mrb[0].mxu0
        %1853 = vdwg.mxu0
        %v1854 = vadd.f32 %v380, %v1600
        %v1855 = vadd.f32 %v381, %v1603
        %v1856 = vadd.f32 %v382, %v1608
        %v1857 = vadd.f32 %v383, %v1611
        %v1858 = vadd.f32 %v384, %v1616
        %v1859 = vadd.f32 %v385, %v1619
        %v1860 = vadd.f32 %v386, %v1624
        %v1861 = vadd.f32 %v387, %v1627
        %v1862 = vadd.f32 %v388, %v1632
        %v1863 = vadd.f32 %v389, %v1635
        %v1864 = vadd.f32 %v390, %v1640
        %v1865 = vadd.f32 %v391, %v1643
        %v1866 = vadd.f32 %v392, %v1648
        %v1867 = vadd.f32 %v393, %v1651
        %v1868 = vadd.f32 %v394, %v1656
        %v1869 = vadd.f32 %v395, %v1659
        %v1870 = vadd.f32 %v396, %v1664
        %v1871 = vadd.f32 %v397, %v1667
        %v1872 = vadd.f32 %v398, %v1672
        %v1873 = vadd.f32 %v399, %v1675
        %v1874 = vadd.f32 %v400, %v1680
        %v1875 = vadd.f32 %v401, %v1683
        %v1876 = vadd.f32 %v402, %v1688
        %v1877 = vadd.f32 %v403, %v1691
        %v1878 = vadd.f32 %v404, %v1696
        %v1879 = vadd.f32 %v405, %v1699
        %v1880 = vadd.f32 %v406, %v1704
        %v1881 = vadd.f32 %v407, %v1707
        %v1882 = vadd.f32 %v408, %v1712
        %v1883 = vadd.f32 %v409, %v1715
        %v1884 = vadd.f32 %v410, %v1720
        %v1885 = vadd.f32 %v411, %v1723
        %v1886 = vadd.f32 %v412, %v1728
        %v1887 = vadd.f32 %v413, %v1731
        %v1888 = vadd.f32 %v414, %v1736
        %v1889 = vadd.f32 %v415, %v1739
        %v1890 = vadd.f32 %v416, %v1744
        %v1891 = vadd.f32 %v417, %v1747
        %v1892 = vadd.f32 %v418, %v1752
        %v1893 = vadd.f32 %v419, %v1755
        %v1894 = vadd.f32 %v420, %v1760
        %v1895 = vadd.f32 %v421, %v1763
        %v1896 = vadd.f32 %v422, %v1768
        %v1897 = vadd.f32 %v423, %v1771
        %v1898 = vadd.f32 %v424, %v1776
        %v1899 = vadd.f32 %v425, %v1779
        %v1900 = vadd.f32 %v426, %v1784
        %v1901 = vadd.f32 %v427, %v1787
        %v1902 = vadd.f32 %v428, %v1792
        %v1903 = vadd.f32 %v429, %v1795
        %v1904 = vadd.f32 %v430, %v1800
        %v1905 = vadd.f32 %v431, %v1803
        %v1906 = vadd.f32 %v432, %v1808
        %v1907 = vadd.f32 %v433, %v1811
        %v1908 = vadd.f32 %v434, %v1816
        %v1909 = vadd.f32 %v435, %v1819
        %v1910 = vadd.f32 %v436, %v1824
        %v1911 = vadd.f32 %v437, %v1827
        %v1912 = vadd.f32 %v438, %v1832
        %v1913 = vadd.f32 %v439, %v1835
        %v1914 = vadd.f32 %v440, %v1840
        %v1915 = vadd.f32 %v441, %v1843
        %v1916 = vadd.f32 %v442, %v1848
        %v1917 = vadd.f32 %v443, %v1851
        %1918 = vst [vmem:[#allocation2] sm:$0xff] %v1854
        %1919 = vst [vmem:[#allocation2 + $0x8] sm:$0xff] %v1855
        %1920 = vst [vmem:[#allocation2 + $0x10] sm:$0xff] %v1856
        %1921 = vst [vmem:[#allocation2 + $0x18] sm:$0xff] %v1857
        %1922 = vst [vmem:[#allocation2 + $0x20] sm:$0xff] %v1858
        %1923 = vst [vmem:[#allocation2 + $0x28] sm:$0xff] %v1859
        %1924 = vst [vmem:[#allocation2 + $0x30] sm:$0xff] %v1860
        %1925 = vst [vmem:[#allocation2 + $0x38] sm:$0xff] %v1861
        %1926 = vst [vmem:[#allocation2 + $0x40] sm:$0xff] %v1862
        %1927 = vst [vmem:[#allocation2 + $0x48] sm:$0xff] %v1863
        %1928 = vst [vmem:[#allocation2 + $0x50] sm:$0xff] %v1864
        %1929 = vst [vmem:[#allocation2 + $0x58] sm:$0xff] %v1865
        %1930 = vst [vmem:[#allocation2 + $0x60] sm:$0xff] %v1866
        %1931 = vst [vmem:[#allocation2 + $0x68] sm:$0xff] %v1867
        %1932 = vst [vmem:[#allocation2 + $0x70] sm:$0xff] %v1868
        %1933 = vst [vmem:[#allocation2 + $0x78] sm:$0xff] %v1869
        %1934 = vst [vmem:[#allocation2 + $0x80] sm:$0xff] %v1870
        %1935 = vst [vmem:[#allocation2 + $0x88] sm:$0xff] %v1871
        %1936 = vst [vmem:[#allocation2 + $0x90] sm:$0xff] %v1872
        %1937 = vst [vmem:[#allocation2 + $0x98] sm:$0xff] %v1873
        %1938 = vst [vmem:[#allocation2 + $0xa0] sm:$0xff] %v1874
        %1939 = vst [vmem:[#allocation2 + $0xa8] sm:$0xff] %v1875
        %1940 = vst [vmem:[#allocation2 + $0xb0] sm:$0xff] %v1876
        %1941 = vst [vmem:[#allocation2 + $0xb8] sm:$0xff] %v1877
        %1942 = vst [vmem:[#allocation2 + $0xc0] sm:$0xff] %v1878
        %1943 = vst [vmem:[#allocation2 + $0xc8] sm:$0xff] %v1879
        %1944 = vst [vmem:[#allocation2 + $0xd0] sm:$0xff] %v1880
        %1945 = vst [vmem:[#allocation2 + $0xd8] sm:$0xff] %v1881
        %1946 = vst [vmem:[#allocation2 + $0xe0] sm:$0xff] %v1882
        %1947 = vst [vmem:[#allocation2 + $0xe8] sm:$0xff] %v1883
        %1948 = vst [vmem:[#allocation2 + $0xf0] sm:$0xff] %v1884
        %1949 = vst [vmem:[#allocation2 + $0xf8] sm:$0xff] %v1885
        %1950 = vst [vmem:[#allocation2 + $0x100] sm:$0xff] %v1886
        %1951 = vst [vmem:[#allocation2 + $0x108] sm:$0xff] %v1887
        %1952 = vst [vmem:[#allocation2 + $0x110] sm:$0xff] %v1888
        %1953 = vst [vmem:[#allocation2 + $0x118] sm:$0xff] %v1889
        %1954 = vst [vmem:[#allocation2 + $0x120] sm:$0xff] %v1890
        %1955 = vst [vmem:[#allocation2 + $0x128] sm:$0xff] %v1891
        %1956 = vst [vmem:[#allocation2 + $0x130] sm:$0xff] %v1892
        %1957 = vst [vmem:[#allocation2 + $0x138] sm:$0xff] %v1893
        %1958 = vst [vmem:[#allocation2 + $0x140] sm:$0xff] %v1894
        %1959 = vst [vmem:[#allocation2 + $0x148] sm:$0xff] %v1895
        %1960 = vst [vmem:[#allocation2 + $0x150] sm:$0xff] %v1896
        %1961 = vst [vmem:[#allocation2 + $0x158] sm:$0xff] %v1897
        %1962 = vst [vmem:[#allocation2 + $0x160] sm:$0xff] %v1898
        %1963 = vst [vmem:[#allocation2 + $0x168] sm:$0xff] %v1899
        %1964 = vst [vmem:[#allocation2 + $0x170] sm:$0xff] %v1900
        %1965 = vst [vmem:[#allocation2 + $0x178] sm:$0xff] %v1901
        %1966 = vst [vmem:[#allocation2 + $0x180] sm:$0xff] %v1902
        %1967 = vst [vmem:[#allocation2 + $0x188] sm:$0xff] %v1903
        %1968 = vst [vmem:[#allocation2 + $0x190] sm:$0xff] %v1904
        %1969 = vst [vmem:[#allocation2 + $0x198] sm:$0xff] %v1905
        %1970 = vst [vmem:[#allocation2 + $0x1a0] sm:$0xff] %v1906
        %1971 = vst [vmem:[#allocation2 + $0x1a8] sm:$0xff] %v1907
        %1972 = vst [vmem:[#allocation2 + $0x1b0] sm:$0xff] %v1908
        %1973 = vst [vmem:[#allocation2 + $0x1b8] sm:$0xff] %v1909
        %1974 = vst [vmem:[#allocation2 + $0x1c0] sm:$0xff] %v1910
        %1975 = vst [vmem:[#allocation2 + $0x1c8] sm:$0xff] %v1911
        %1976 = vst [vmem:[#allocation2 + $0x1d0] sm:$0xff] %v1912
        %1977 = vst [vmem:[#allocation2 + $0x1d8] sm:$0xff] %v1913
        %1978 = vst [vmem:[#allocation2 + $0x1e0] sm:$0xff] %v1914
        %1979 = vst [vmem:[#allocation2 + $0x1e8] sm:$0xff] %v1915
        %1980 = vst [vmem:[#allocation2 + $0x1f0] sm:$0xff] %v1916
        %1981 = vst [vmem:[#allocation2 + $0x1f8] sm:$0xff] %v1917
        // Predicated region
        $region41: #{tpu_custom_call.1} parent=27 // pred_check
          _
        $region42: #{tpu_custom_call.1} parent=27 // pred_check_branch
          %1983 = sbr.rel (%p312) target = $region44
        $region43: #{tpu_custom_call.1} parent=27 // pred_region
          %v1984 = vld [vmem:[#allocation2] sm:$0xff]
          %v1985 = vld [vmem:[#allocation2 + $0x8] sm:$0xff]
          %v1986 = vld [vmem:[#allocation2 + $0x10] sm:$0xff]
          %v1987 = vld [vmem:[#allocation2 + $0x18] sm:$0xff]
          %v1988 = vld [vmem:[#allocation2 + $0x20] sm:$0xff]
          %v1989 = vld [vmem:[#allocation2 + $0x28] sm:$0xff]
          %v1990 = vld [vmem:[#allocation2 + $0x30] sm:$0xff]
          %v1991 = vld [vmem:[#allocation2 + $0x38] sm:$0xff]
          %v1992 = vld [vmem:[#allocation2 + $0x40] sm:$0xff]
          %v1993 = vld [vmem:[#allocation2 + $0x48] sm:$0xff]
          %v1994 = vld [vmem:[#allocation2 + $0x50] sm:$0xff]
          %v1995 = vld [vmem:[#allocation2 + $0x58] sm:$0xff]
          %v1996 = vld [vmem:[#allocation2 + $0x60] sm:$0xff]
          %v1997 = vld [vmem:[#allocation2 + $0x68] sm:$0xff]
          %v1998 = vld [vmem:[#allocation2 + $0x70] sm:$0xff]
          %v1999 = vld [vmem:[#allocation2 + $0x78] sm:$0xff]
          %v2000 = vld [vmem:[#allocation2 + $0x80] sm:$0xff]
          %v2001 = vld [vmem:[#allocation2 + $0x88] sm:$0xff]
          %v2002 = vld [vmem:[#allocation2 + $0x90] sm:$0xff]
          %v2003 = vld [vmem:[#allocation2 + $0x98] sm:$0xff]
          %v2004 = vld [vmem:[#allocation2 + $0xa0] sm:$0xff]
          %v2005 = vld [vmem:[#allocation2 + $0xa8] sm:$0xff]
          %v2006 = vld [vmem:[#allocation2 + $0xb0] sm:$0xff]
          %v2007 = vld [vmem:[#allocation2 + $0xb8] sm:$0xff]
          %v2008 = vld [vmem:[#allocation2 + $0xc0] sm:$0xff]
          %v2009 = vld [vmem:[#allocation2 + $0xc8] sm:$0xff]
          %v2010 = vld [vmem:[#allocation2 + $0xd0] sm:$0xff]
          %v2011 = vld [vmem:[#allocation2 + $0xd8] sm:$0xff]
          %v2012 = vld [vmem:[#allocation2 + $0xe0] sm:$0xff]
          %v2013 = vld [vmem:[#allocation2 + $0xe8] sm:$0xff]
          %v2014 = vld [vmem:[#allocation2 + $0xf0] sm:$0xff]
          %v2015 = vld [vmem:[#allocation2 + $0xf8] sm:$0xff]
          %v2016 = vld [vmem:[#allocation2 + $0x100] sm:$0xff]
          %v2017 = vld [vmem:[#allocation2 + $0x108] sm:$0xff]
          %v2018 = vld [vmem:[#allocation2 + $0x110] sm:$0xff]
          %v2019 = vld [vmem:[#allocation2 + $0x118] sm:$0xff]
          %v2020 = vld [vmem:[#allocation2 + $0x120] sm:$0xff]
          %v2021 = vld [vmem:[#allocation2 + $0x128] sm:$0xff]
          %v2022 = vld [vmem:[#allocation2 + $0x130] sm:$0xff]
          %v2023 = vld [vmem:[#allocation2 + $0x138] sm:$0xff]
          %v2024 = vld [vmem:[#allocation2 + $0x140] sm:$0xff]
          %v2025 = vld [vmem:[#allocation2 + $0x148] sm:$0xff]
          %v2026 = vld [vmem:[#allocation2 + $0x150] sm:$0xff]
          %v2027 = vld [vmem:[#allocation2 + $0x158] sm:$0xff]
          %v2028 = vld [vmem:[#allocation2 + $0x160] sm:$0xff]
          %v2029 = vld [vmem:[#allocation2 + $0x168] sm:$0xff]
          %v2030 = vld [vmem:[#allocation2 + $0x170] sm:$0xff]
          %v2031 = vld [vmem:[#allocation2 + $0x178] sm:$0xff]
          %v2032 = vld [vmem:[#allocation2 + $0x180] sm:$0xff]
          %v2033 = vld [vmem:[#allocation2 + $0x188] sm:$0xff]
          %v2034 = vld [vmem:[#allocation2 + $0x190] sm:$0xff]
          %v2035 = vld [vmem:[#allocation2 + $0x198] sm:$0xff]
          %v2036 = vld [vmem:[#allocation2 + $0x1a0] sm:$0xff]
          %v2037 = vld [vmem:[#allocation2 + $0x1a8] sm:$0xff]
          %v2038 = vld [vmem:[#allocation2 + $0x1b0] sm:$0xff]
          %v2039 = vld [vmem:[#allocation2 + $0x1b8] sm:$0xff]
          %v2040 = vld [vmem:[#allocation2 + $0x1c0] sm:$0xff]
          %v2041 = vld [vmem:[#allocation2 + $0x1c8] sm:$0xff]
          %v2042 = vld [vmem:[#allocation2 + $0x1d0] sm:$0xff]
          %v2043 = vld [vmem:[#allocation2 + $0x1d8] sm:$0xff]
          %v2044 = vld [vmem:[#allocation2 + $0x1e0] sm:$0xff]
          %v2045 = vld [vmem:[#allocation2 + $0x1e8] sm:$0xff]
          %v2046 = vld [vmem:[#allocation2 + $0x1f0] sm:$0xff]
          %v2047 = vld [vmem:[#allocation2 + $0x1f8] sm:$0xff]
          %v2048 = vpack.c.bf16 %v1985, %v1984
          %v2049 = vpack.c.bf16 %v1987, %v1986
          %v2050 = vpack.c.bf16 %v1989, %v1988
          %v2051 = vpack.c.bf16 %v1991, %v1990
          %v2052 = vpack.c.bf16 %v1993, %v1992
          %v2053 = vpack.c.bf16 %v1995, %v1994
          %v2054 = vpack.c.bf16 %v1997, %v1996
          %v2055 = vpack.c.bf16 %v1999, %v1998
          %v2056 = vpack.c.bf16 %v2001, %v2000
          %v2057 = vpack.c.bf16 %v2003, %v2002
          %v2058 = vpack.c.bf16 %v2005, %v2004
          %v2059 = vpack.c.bf16 %v2007, %v2006
          %v2060 = vpack.c.bf16 %v2009, %v2008
          %v2061 = vpack.c.bf16 %v2011, %v2010
          %v2062 = vpack.c.bf16 %v2013, %v2012
          %v2063 = vpack.c.bf16 %v2015, %v2014
          %v2064 = vpack.c.bf16 %v2017, %v2016
          %v2065 = vpack.c.bf16 %v2019, %v2018
          %v2066 = vpack.c.bf16 %v2021, %v2020
          %v2067 = vpack.c.bf16 %v2023, %v2022
          %v2068 = vpack.c.bf16 %v2025, %v2024
          %v2069 = vpack.c.bf16 %v2027, %v2026
          %v2070 = vpack.c.bf16 %v2029, %v2028
          %v2071 = vpack.c.bf16 %v2031, %v2030
          %v2072 = vpack.c.bf16 %v2033, %v2032
          %v2073 = vpack.c.bf16 %v2035, %v2034
          %v2074 = vpack.c.bf16 %v2037, %v2036
          %v2075 = vpack.c.bf16 %v2039, %v2038
          %v2076 = vpack.c.bf16 %v2041, %v2040
          %v2077 = vpack.c.bf16 %v2043, %v2042
          %v2078 = vpack.c.bf16 %v2045, %v2044
          %v2079 = vpack.c.bf16 %v2047, %v2046
          %v2112 = vunpack.c.l.b16 %v2048
          %v2113 = vunpack.c.h.b16 %v2048
          %v2114 = vunpack.c.l.b16 %v2049
          %v2115 = vunpack.c.h.b16 %v2049
          %v2116 = vunpack.c.l.b16 %v2050
          %v2117 = vunpack.c.h.b16 %v2050
          %v2118 = vunpack.c.l.b16 %v2051
          %v2119 = vunpack.c.h.b16 %v2051
          %v2120 = vunpack.c.l.b16 %v2052
          %v2121 = vunpack.c.h.b16 %v2052
          %v2122 = vunpack.c.l.b16 %v2053
          %v2123 = vunpack.c.h.b16 %v2053
          %v2124 = vunpack.c.l.b16 %v2054
          %v2125 = vunpack.c.h.b16 %v2054
          %v2126 = vunpack.c.l.b16 %v2055
          %v2127 = vunpack.c.h.b16 %v2055
          %v2128 = vunpack.c.l.b16 %v2056
          %v2129 = vunpack.c.h.b16 %v2056
          %v2130 = vunpack.c.l.b16 %v2057
          %v2131 = vunpack.c.h.b16 %v2057
          %v2132 = vunpack.c.l.b16 %v2058
          %v2133 = vunpack.c.h.b16 %v2058
          %v2134 = vunpack.c.l.b16 %v2059
          %v2135 = vunpack.c.h.b16 %v2059
          %v2136 = vunpack.c.l.b16 %v2060
          %v2137 = vunpack.c.h.b16 %v2060
          %v2138 = vunpack.c.l.b16 %v2061
          %v2139 = vunpack.c.h.b16 %v2061
          %v2140 = vunpack.c.l.b16 %v2062
          %v2141 = vunpack.c.h.b16 %v2062
          %v2142 = vunpack.c.l.b16 %v2063
          %v2143 = vunpack.c.h.b16 %v2063
          %v2144 = vunpack.c.l.b16 %v2064
          %v2145 = vunpack.c.h.b16 %v2064
          %v2146 = vunpack.c.l.b16 %v2065
          %v2147 = vunpack.c.h.b16 %v2065
          %v2148 = vunpack.c.l.b16 %v2066
          %v2149 = vunpack.c.h.b16 %v2066
          %v2150 = vunpack.c.l.b16 %v2067
          %v2151 = vunpack.c.h.b16 %v2067
          %v2152 = vunpack.c.l.b16 %v2068
          %v2153 = vunpack.c.h.b16 %v2068
          %v2154 = vunpack.c.l.b16 %v2069
          %v2155 = vunpack.c.h.b16 %v2069
          %v2156 = vunpack.c.l.b16 %v2070
          %v2157 = vunpack.c.h.b16 %v2070
          %v2158 = vunpack.c.l.b16 %v2071
          %v2159 = vunpack.c.h.b16 %v2071
          %v2160 = vunpack.c.l.b16 %v2072
          %v2161 = vunpack.c.h.b16 %v2072
          %v2162 = vunpack.c.l.b16 %v2073
          %v2163 = vunpack.c.h.b16 %v2073
          %v2164 = vunpack.c.l.b16 %v2074
          %v2165 = vunpack.c.h.b16 %v2074
          %v2166 = vunpack.c.l.b16 %v2075
          %v2167 = vunpack.c.h.b16 %v2075
          %v2168 = vunpack.c.l.b16 %v2076
          %v2169 = vunpack.c.h.b16 %v2076
          %v2170 = vunpack.c.l.b16 %v2077
          %v2171 = vunpack.c.h.b16 %v2077
          %v2172 = vunpack.c.l.b16 %v2078
          %v2173 = vunpack.c.h.b16 %v2078
          %v2174 = vunpack.c.l.b16 %v2079
          %v2175 = vunpack.c.h.b16 %v2079
          %v2176 = vpack.c.b16 %v2112, %v2112
          %v2177 = vpack.c.b16 %v2113, %v2113
          %v2178 = vpack.c.b16 %v2114, %v2114
          %v2179 = vpack.c.b16 %v2115, %v2115
          %v2180 = vpack.c.b16 %v2116, %v2116
          %v2181 = vpack.c.b16 %v2117, %v2117
          %v2182 = vpack.c.b16 %v2118, %v2118
          %v2183 = vpack.c.b16 %v2119, %v2119
          %v2184 = vpack.c.b16 %v2120, %v2120
          %v2185 = vpack.c.b16 %v2121, %v2121
          %v2186 = vpack.c.b16 %v2122, %v2122
          %v2187 = vpack.c.b16 %v2123, %v2123
          %v2188 = vpack.c.b16 %v2124, %v2124
          %v2189 = vpack.c.b16 %v2125, %v2125
          %v2190 = vpack.c.b16 %v2126, %v2126
          %v2191 = vpack.c.b16 %v2127, %v2127
          %v2192 = vpack.c.b16 %v2128, %v2128
          %v2193 = vpack.c.b16 %v2129, %v2129
          %v2194 = vpack.c.b16 %v2130, %v2130
          %v2195 = vpack.c.b16 %v2131, %v2131
          %v2196 = vpack.c.b16 %v2132, %v2132
          %v2197 = vpack.c.b16 %v2133, %v2133
          %v2198 = vpack.c.b16 %v2134, %v2134
          %v2199 = vpack.c.b16 %v2135, %v2135
          %v2200 = vpack.c.b16 %v2136, %v2136
          %v2201 = vpack.c.b16 %v2137, %v2137
          %v2202 = vpack.c.b16 %v2138, %v2138
          %v2203 = vpack.c.b16 %v2139, %v2139
          %v2204 = vpack.c.b16 %v2140, %v2140
          %v2205 = vpack.c.b16 %v2141, %v2141
          %v2206 = vpack.c.b16 %v2142, %v2142
          %v2207 = vpack.c.b16 %v2143, %v2143
          %v2208 = vpack.c.b16 %v2144, %v2144
          %v2209 = vpack.c.b16 %v2145, %v2145
          %v2210 = vpack.c.b16 %v2146, %v2146
          %v2211 = vpack.c.b16 %v2147, %v2147
          %v2212 = vpack.c.b16 %v2148, %v2148
          %v2213 = vpack.c.b16 %v2149, %v2149
          %v2214 = vpack.c.b16 %v2150, %v2150
          %v2215 = vpack.c.b16 %v2151, %v2151
          %v2216 = vpack.c.b16 %v2152, %v2152
          %v2217 = vpack.c.b16 %v2153, %v2153
          %v2218 = vpack.c.b16 %v2154, %v2154
          %v2219 = vpack.c.b16 %v2155, %v2155
          %v2220 = vpack.c.b16 %v2156, %v2156
          %v2221 = vpack.c.b16 %v2157, %v2157
          %v2222 = vpack.c.b16 %v2158, %v2158
          %v2223 = vpack.c.b16 %v2159, %v2159
          %v2224 = vpack.c.b16 %v2160, %v2160
          %v2225 = vpack.c.b16 %v2161, %v2161
          %v2226 = vpack.c.b16 %v2162, %v2162
          %v2227 = vpack.c.b16 %v2163, %v2163
          %v2228 = vpack.c.b16 %v2164, %v2164
          %v2229 = vpack.c.b16 %v2165, %v2165
          %v2230 = vpack.c.b16 %v2166, %v2166
          %v2231 = vpack.c.b16 %v2167, %v2167
          %v2232 = vpack.c.b16 %v2168, %v2168
          %v2233 = vpack.c.b16 %v2169, %v2169
          %v2234 = vpack.c.b16 %v2170, %v2170
          %v2235 = vpack.c.b16 %v2171, %v2171
          %v2236 = vpack.c.b16 %v2172, %v2172
          %v2237 = vpack.c.b16 %v2173, %v2173
          %v2238 = vpack.c.b16 %v2174, %v2174
          %v2239 = vpack.c.b16 %v2175, %v2175
          %2304 = vst [vmem:[%s290] sm:$0xf] %v2176
          %2305 = vst [vmem:[%s290 + $0x4] sm:$0xf] %v2177
          %2306 = vst [vmem:[%s290 + $0x8] sm:$0xf] %v2178
          %2307 = vst [vmem:[%s290 + $0xc] sm:$0xf] %v2179
          %2308 = vst [vmem:[%s290 + $0x10] sm:$0xf] %v2180
          %2309 = vst [vmem:[%s290 + $0x14] sm:$0xf] %v2181
          %2310 = vst [vmem:[%s290 + $0x18] sm:$0xf] %v2182
          %2311 = vst [vmem:[%s290 + $0x1c] sm:$0xf] %v2183
          %2312 = vst [vmem:[%s290 + $0x20] sm:$0xf] %v2184
          %2313 = vst [vmem:[%s290 + $0x24] sm:$0xf] %v2185
          %2314 = vst [vmem:[%s290 + $0x28] sm:$0xf] %v2186
          %2315 = vst [vmem:[%s290 + $0x2c] sm:$0xf] %v2187
          %2316 = vst [vmem:[%s290 + $0x30] sm:$0xf] %v2188
          %2317 = vst [vmem:[%s290 + $0x34] sm:$0xf] %v2189
          %2318 = vst [vmem:[%s290 + $0x38] sm:$0xf] %v2190
          %2319 = vst [vmem:[%s290 + $0x3c] sm:$0xf] %v2191
          %2320 = vst [vmem:[%s290 + $0x40] sm:$0xf] %v2192
          %2321 = vst [vmem:[%s290 + $0x44] sm:$0xf] %v2193
          %2322 = vst [vmem:[%s290 + $0x48] sm:$0xf] %v2194
          %2323 = vst [vmem:[%s290 + $0x4c] sm:$0xf] %v2195
          %2324 = vst [vmem:[%s290 + $0x50] sm:$0xf] %v2196
          %2325 = vst [vmem:[%s290 + $0x54] sm:$0xf] %v2197
          %2326 = vst [vmem:[%s290 + $0x58] sm:$0xf] %v2198
          %2327 = vst [vmem:[%s290 + $0x5c] sm:$0xf] %v2199
          %2328 = vst [vmem:[%s290 + $0x60] sm:$0xf] %v2200
          %2329 = vst [vmem:[%s290 + $0x64] sm:$0xf] %v2201
          %2330 = vst [vmem:[%s290 + $0x68] sm:$0xf] %v2202
          %2331 = vst [vmem:[%s290 + $0x6c] sm:$0xf] %v2203
          %2332 = vst [vmem:[%s290 + $0x70] sm:$0xf] %v2204
          %2333 = vst [vmem:[%s290 + $0x74] sm:$0xf] %v2205
          %2334 = vst [vmem:[%s290 + $0x78] sm:$0xf] %v2206
          %2335 = vst [vmem:[%s290 + $0x7c] sm:$0xf] %v2207
          %2336 = vst [vmem:[%s290 + $0x80] sm:$0xf] %v2208
          %2337 = vst [vmem:[%s290 + $0x84] sm:$0xf] %v2209
          %2338 = vst [vmem:[%s290 + $0x88] sm:$0xf] %v2210
          %2339 = vst [vmem:[%s290 + $0x8c] sm:$0xf] %v2211
          %2340 = vst [vmem:[%s290 + $0x90] sm:$0xf] %v2212
          %2341 = vst [vmem:[%s290 + $0x94] sm:$0xf] %v2213
          %2342 = vst [vmem:[%s290 + $0x98] sm:$0xf] %v2214
          %2343 = vst [vmem:[%s290 + $0x9c] sm:$0xf] %v2215
          %2344 = vst [vmem:[%s290 + $0xa0] sm:$0xf] %v2216
          %2345 = vst [vmem:[%s290 + $0xa4] sm:$0xf] %v2217
          %2346 = vst [vmem:[%s290 + $0xa8] sm:$0xf] %v2218
          %2347 = vst [vmem:[%s290 + $0xac] sm:$0xf] %v2219
          %2348 = vst [vmem:[%s290 + $0xb0] sm:$0xf] %v2220
          %2349 = vst [vmem:[%s290 + $0xb4] sm:$0xf] %v2221
          %2350 = vst [vmem:[%s290 + $0xb8] sm:$0xf] %v2222
          %2351 = vst [vmem:[%s290 + $0xbc] sm:$0xf] %v2223
          %2352 = vst [vmem:[%s290 + $0xc0] sm:$0xf] %v2224
          %2353 = vst [vmem:[%s290 + $0xc4] sm:$0xf] %v2225
          %2354 = vst [vmem:[%s290 + $0xc8] sm:$0xf] %v2226
          %2355 = vst [vmem:[%s290 + $0xcc] sm:$0xf] %v2227
          %2356 = vst [vmem:[%s290 + $0xd0] sm:$0xf] %v2228
          %2357 = vst [vmem:[%s290 + $0xd4] sm:$0xf] %v2229
          %2358 = vst [vmem:[%s290 + $0xd8] sm:$0xf] %v2230
          %2359 = vst [vmem:[%s290 + $0xdc] sm:$0xf] %v2231
          %2360 = vst [vmem:[%s290 + $0xe0] sm:$0xf] %v2232
          %2361 = vst [vmem:[%s290 + $0xe4] sm:$0xf] %v2233
          %2362 = vst [vmem:[%s290 + $0xe8] sm:$0xf] %v2234
          %2363 = vst [vmem:[%s290 + $0xec] sm:$0xf] %v2235
          %2364 = vst [vmem:[%s290 + $0xf0] sm:$0xf] %v2236
          %2365 = vst [vmem:[%s290 + $0xf4] sm:$0xf] %v2237
          %2366 = vst [vmem:[%s290 + $0xf8] sm:$0xf] %v2238
          %2367 = vst [vmem:[%s290 + $0xfc] sm:$0xf] %v2239
          %v2368 = vlaneseq
          %v2369 = vshrl.u32 %v2368, 7
          %vm2370 = vcmp.eq.s32.totalorder %v2369, 0
          %v2371 = vadd.f32 %v1984, %v1985
          %v2372 = vadd.f32 %v2371, %v1986
          %v2373 = vadd.f32 %v2372, %v1987
          %v2374 = vadd.f32 %v2373, %v1988
          %v2375 = vadd.f32 %v2374, %v1989
          %v2376 = vadd.f32 %v2375, %v1990
          %v2377 = vadd.f32 %v2376, %v1991
          %v2378 = vadd.f32 %v2377, %v1992
          %v2379 = vadd.f32 %v2378, %v1993
          %v2380 = vadd.f32 %v2379, %v1994
          %v2381 = vadd.f32 %v2380, %v1995
          %v2382 = vadd.f32 %v2381, %v1996
          %v2383 = vadd.f32 %v2382, %v1997
          %v2384 = vadd.f32 %v2383, %v1998
          %v2385 = vadd.f32 %v2384, %v1999
          %v2386 = vadd.f32 %v2385, %v2000
          %v2387 = vadd.f32 %v2386, %v2001
          %v2388 = vadd.f32 %v2387, %v2002
          %v2389 = vadd.f32 %v2388, %v2003
          %v2390 = vadd.f32 %v2389, %v2004
          %v2391 = vadd.f32 %v2390, %v2005
          %v2392 = vadd.f32 %v2391, %v2006
          %v2393 = vadd.f32 %v2392, %v2007
          %v2394 = vadd.f32 %v2393, %v2008
          %v2395 = vadd.f32 %v2394, %v2009
          %v2396 = vadd.f32 %v2395, %v2010
          %v2397 = vadd.f32 %v2396, %v2011
          %v2398 = vadd.f32 %v2397, %v2012
          %v2399 = vadd.f32 %v2398, %v2013
          %v2400 = vadd.f32 %v2399, %v2014
          %v2401 = vadd.f32 %v2400, %v2015
          %v2402 = vadd.f32 %v2401, %v2016
          %v2403 = vadd.f32 %v2402, %v2017
          %v2404 = vadd.f32 %v2403, %v2018
          %v2405 = vadd.f32 %v2404, %v2019
          %v2406 = vadd.f32 %v2405, %v2020
          %v2407 = vadd.f32 %v2406, %v2021
          %v2408 = vadd.f32 %v2407, %v2022
          %v2409 = vadd.f32 %v2408, %v2023
          %v2410 = vadd.f32 %v2409, %v2024
          %v2411 = vadd.f32 %v2410, %v2025
          %v2412 = vadd.f32 %v2411, %v2026
          %v2413 = vadd.f32 %v2412, %v2027
          %v2414 = vadd.f32 %v2413, %v2028
          %v2415 = vadd.f32 %v2414, %v2029
          %v2416 = vadd.f32 %v2415, %v2030
          %v2417 = vadd.f32 %v2416, %v2031
          %v2418 = vadd.f32 %v2417, %v2032
          %v2419 = vadd.f32 %v2418, %v2033
          %v2420 = vadd.f32 %v2419, %v2034
          %v2421 = vadd.f32 %v2420, %v2035
          %v2422 = vadd.f32 %v2421, %v2036
          %v2423 = vadd.f32 %v2422, %v2037
          %v2424 = vadd.f32 %v2423, %v2038
          %v2425 = vadd.f32 %v2424, %v2039
          %v2426 = vadd.f32 %v2425, %v2040
          %v2427 = vadd.f32 %v2426, %v2041
          %v2428 = vadd.f32 %v2427, %v2042
          %v2429 = vadd.f32 %v2428, %v2043
          %v2430 = vadd.f32 %v2429, %v2044
          %v2431 = vadd.f32 %v2430, %v2045
          %v2432 = vadd.f32 %v2431, %v2046
          %v2433 = vadd.f32 %v2432, %v2047
          %v2434 = vrot.slane %v2433, 4
          %v2435 = vadd.f32 %v2433, %v2434
          %v2436 = vrot.slane %v2435, 2
          %v2437 = vadd.f32 %v2435, %v2436
          %v2438 = vrot.slane %v2437, 1
          %v2439 = vadd.f32 %v2437, %v2438
          %v2440 = vsel %vm2370, %v2439, 0.0
          %2441 = vst [vmem:[%s297] sm:$0xff] %v2440
          %v2442 = vmul.f32 %v1984, %v1984
          %v2443 = vmul.f32 %v1985, %v1985
          %v2444 = vmul.f32 %v1986, %v1986
          %v2445 = vmul.f32 %v1987, %v1987
          %v2446 = vmul.f32 %v1988, %v1988
          %v2447 = vmul.f32 %v1989, %v1989
          %v2448 = vmul.f32 %v1990, %v1990
          %v2449 = vmul.f32 %v1991, %v1991
          %v2450 = vmul.f32 %v1992, %v1992
          %v2451 = vmul.f32 %v1993, %v1993
          %v2452 = vmul.f32 %v1994, %v1994
          %v2453 = vmul.f32 %v1995, %v1995
          %v2454 = vmul.f32 %v1996, %v1996
          %v2455 = vmul.f32 %v1997, %v1997
          %v2456 = vmul.f32 %v1998, %v1998
          %v2457 = vmul.f32 %v1999, %v1999
          %v2458 = vmul.f32 %v2000, %v2000
          %v2459 = vmul.f32 %v2001, %v2001
          %v2460 = vmul.f32 %v2002, %v2002
          %v2461 = vmul.f32 %v2003, %v2003
          %v2462 = vmul.f32 %v2004, %v2004
          %v2463 = vmul.f32 %v2005, %v2005
          %v2464 = vmul.f32 %v2006, %v2006
          %v2465 = vmul.f32 %v2007, %v2007
          %v2466 = vmul.f32 %v2008, %v2008
          %v2467 = vmul.f32 %v2009, %v2009
          %v2468 = vmul.f32 %v2010, %v2010
          %v2469 = vmul.f32 %v2011, %v2011
          %v2470 = vmul.f32 %v2012, %v2012
          %v2471 = vmul.f32 %v2013, %v2013
          %v2472 = vmul.f32 %v2014, %v2014
          %v2473 = vmul.f32 %v2015, %v2015
          %v2474 = vmul.f32 %v2016, %v2016
          %v2475 = vmul.f32 %v2017, %v2017
          %v2476 = vmul.f32 %v2018, %v2018
          %v2477 = vmul.f32 %v2019, %v2019
          %v2478 = vmul.f32 %v2020, %v2020
          %v2479 = vmul.f32 %v2021, %v2021
          %v2480 = vmul.f32 %v2022, %v2022
          %v2481 = vmul.f32 %v2023, %v2023
          %v2482 = vmul.f32 %v2024, %v2024
          %v2483 = vmul.f32 %v2025, %v2025
          %v2484 = vmul.f32 %v2026, %v2026
          %v2485 = vmul.f32 %v2027, %v2027
          %v2486 = vmul.f32 %v2028, %v2028
          %v2487 = vmul.f32 %v2029, %v2029
          %v2488 = vmul.f32 %v2030, %v2030
          %v2489 = vmul.f32 %v2031, %v2031
          %v2490 = vmul.f32 %v2032, %v2032
          %v2491 = vmul.f32 %v2033, %v2033
          %v2492 = vmul.f32 %v2034, %v2034
          %v2493 = vmul.f32 %v2035, %v2035
          %v2494 = vmul.f32 %v2036, %v2036
          %v2495 = vmul.f32 %v2037, %v2037
          %v2496 = vmul.f32 %v2038, %v2038
          %v2497 = vmul.f32 %v2039, %v2039
          %v2498 = vmul.f32 %v2040, %v2040
          %v2499 = vmul.f32 %v2041, %v2041
          %v2500 = vmul.f32 %v2042, %v2042
          %v2501 = vmul.f32 %v2043, %v2043
          %v2502 = vmul.f32 %v2044, %v2044
          %v2503 = vmul.f32 %v2045, %v2045
          %v2504 = vmul.f32 %v2046, %v2046
          %v2505 = vmul.f32 %v2047, %v2047
          %v2506 = vadd.f32 %v2442, %v2443
          %v2507 = vadd.f32 %v2506, %v2444
          %v2508 = vadd.f32 %v2507, %v2445
          %v2509 = vadd.f32 %v2508, %v2446
          %v2510 = vadd.f32 %v2509, %v2447
          %v2511 = vadd.f32 %v2510, %v2448
          %v2512 = vadd.f32 %v2511, %v2449
          %v2513 = vadd.f32 %v2512, %v2450
          %v2514 = vadd.f32 %v2513, %v2451
          %v2515 = vadd.f32 %v2514, %v2452
          %v2516 = vadd.f32 %v2515, %v2453
          %v2517 = vadd.f32 %v2516, %v2454
          %v2518 = vadd.f32 %v2517, %v2455
          %v2519 = vadd.f32 %v2518, %v2456
          %v2520 = vadd.f32 %v2519, %v2457
          %v2521 = vadd.f32 %v2520, %v2458
          %v2522 = vadd.f32 %v2521, %v2459
          %v2523 = vadd.f32 %v2522, %v2460
          %v2524 = vadd.f32 %v2523, %v2461
          %v2525 = vadd.f32 %v2524, %v2462
          %v2526 = vadd.f32 %v2525, %v2463
          %v2527 = vadd.f32 %v2526, %v2464
          %v2528 = vadd.f32 %v2527, %v2465
          %v2529 = vadd.f32 %v2528, %v2466
          %v2530 = vadd.f32 %v2529, %v2467
          %v2531 = vadd.f32 %v2530, %v2468
          %v2532 = vadd.f32 %v2531, %v2469
          %v2533 = vadd.f32 %v2532, %v2470
          %v2534 = vadd.f32 %v2533, %v2471
          %v2535 = vadd.f32 %v2534, %v2472
          %v2536 = vadd.f32 %v2535, %v2473
          %v2537 = vadd.f32 %v2536, %v2474
          %v2538 = vadd.f32 %v2537, %v2475
          %v2539 = vadd.f32 %v2538, %v2476
          %v2540 = vadd.f32 %v2539, %v2477
          %v2541 = vadd.f32 %v2540, %v2478
          %v2542 = vadd.f32 %v2541, %v2479
          %v2543 = vadd.f32 %v2542, %v2480
          %v2544 = vadd.f32 %v2543, %v2481
          %v2545 = vadd.f32 %v2544, %v2482
          %v2546 = vadd.f32 %v2545, %v2483
          %v2547 = vadd.f32 %v2546, %v2484
          %v2548 = vadd.f32 %v2547, %v2485
          %v2549 = vadd.f32 %v2548, %v2486
          %v2550 = vadd.f32 %v2549, %v2487
          %v2551 = vadd.f32 %v2550, %v2488
          %v2552 = vadd.f32 %v2551, %v2489
          %v2553 = vadd.f32 %v2552, %v2490
          %v2554 = vadd.f32 %v2553, %v2491
          %v2555 = vadd.f32 %v2554, %v2492
          %v2556 = vadd.f32 %v2555, %v2493
          %v2557 = vadd.f32 %v2556, %v2494
          %v2558 = vadd.f32 %v2557, %v2495
          %v2559 = vadd.f32 %v2558, %v2496
          %v2560 = vadd.f32 %v2559, %v2497
          %v2561 = vadd.f32 %v2560, %v2498
          %v2562 = vadd.f32 %v2561, %v2499
          %v2563 = vadd.f32 %v2562, %v2500
          %v2564 = vadd.f32 %v2563, %v2501
          %v2565 = vadd.f32 %v2564, %v2502
          %v2566 = vadd.f32 %v2565, %v2503
          %v2567 = vadd.f32 %v2566, %v2504
          %v2568 = vadd.f32 %v2567, %v2505
          %v2569 = vrot.slane %v2568, 4
          %v2570 = vadd.f32 %v2568, %v2569
          %v2571 = vrot.slane %v2570, 2
          %v2572 = vadd.f32 %v2570, %v2571
          %v2573 = vrot.slane %v2572, 1
          %v2574 = vadd.f32 %v2572, %v2573
          %v2575 = vsel %vm2370, %v2574, 0.0
          %2576 = vst [vmem:[%s304] sm:$0xff] %v2575
        $region44: #{tpu_custom_call.1} parent=27 // pred_fallthru
          _
        %s2577 = sand.u32 %s122, 1
        %s2578 = scalar_lea.sflag [#allocation5], %s2577
        %s2579 = sand.u32 %s122, 1
        %s2580 = smul.addr %s2579, 256
        %s2581 = scalar_lea.vmem [#allocation8], %s2580
        %s2582 = sand.u32 %s26, 1
        %s2583 = scalar_lea.sflag [#allocation10], %s2582
        %s2584 = sand.u32 %s150, 1
        %s2585 = smul.addr %s2584, 8
        %s2586 = scalar_lea.vmem [#allocation9], %s2585
        %s2587 = sand.u32 %s26, 1
        %s2588 = scalar_lea.sflag [#allocation10], %s2587
        %s2589 = sand.u32 %s178, 1
        %s2590 = smul.addr %s2589, 8
        %s2591 = scalar_lea.vmem [#allocation11], %s2590
        // Predicated region
        $region45: #{tpu_custom_call.1} parent=27 // pred_check
          %p2592 = pneg %p132
        $region46: #{tpu_custom_call.1} parent=27 // pred_check_branch
          %2594 = sbr.rel (%p2592) target = $region48
        $region47: #{tpu_custom_call.1} parent=27 // pred_region
          %s2595 = smul.u32 64, %s32
          %s2597 = ssub.s32 4096, 4096
          %2598 = vsyncadd %s2578, %s2597
          %s2599 = sadd.s32 %s33, %s2595
          %s2600 = smul.addr %s2599, 64
          %s2601 = scalar_lea.hbm %s2, %s2600
          %s2602 = sshll.u32 %s2581, 4
          %s2603 = int_to_ptr.vmem [resolvable:$true] %s2602
          %2608 = dma.vmem_to_hbm [thread:$0]  %s2603, 4096, %s2601, %s2578, 64, 64, 4
        $region48: #{tpu_custom_call.1} parent=27 // pred_fallthru
          _
        // Predicated region
        $region49: #{tpu_custom_call.1} parent=27 // pred_check
          %p2609 = pneg %p160
        $region50: #{tpu_custom_call.1} parent=27 // pred_check_branch
          %2611 = sbr.rel (%p2609) target = $region52
        $region51: #{tpu_custom_call.1} parent=27 // pred_region
          %s2613 = ssub.s32 128, 128
          %2614 = vsyncadd %s2583, %s2613
          %s2615 = sadd.s32 %s33, %s32
          %s2616 = smul.addr %s2615, 128
          %s2617 = scalar_lea.hbm %s3, %s2616
          %s2619 = sshll.u32 %s2586, 4
          %s2620 = int_to_ptr.vmem [resolvable:$true] %s2619
          %2622 = dma.vmem_to_hbm [thread:$0]  %s2620, 128, %s2617, %s2583
        $region52: #{tpu_custom_call.1} parent=27 // pred_fallthru
          _
        // Predicated region
        $region53: #{tpu_custom_call.1} parent=27 // pred_check
          %p2623 = pneg %p188
        $region54: #{tpu_custom_call.1} parent=27 // pred_check_branch
          %2625 = sbr.rel (%p2623) target = $region56
        $region55: #{tpu_custom_call.1} parent=27 // pred_region
          %s2627 = ssub.s32 128, 128
          %2628 = vsyncadd %s2588, %s2627
          %s2629 = sadd.s32 %s33, %s32
          %s2630 = smul.addr %s2629, 128
          %s2631 = scalar_lea.hbm %s4, %s2630
          %s2633 = sshll.u32 %s2591, 4
          %s2634 = int_to_ptr.vmem [resolvable:$true] %s2633
          %2636 = dma.vmem_to_hbm [thread:$0]  %s2634, 128, %s2631, %s2588
        $region56: #{tpu_custom_call.1} parent=27 // pred_fallthru
          _
      $region28: #{tpu_custom_call.1} parent=5 // pred_fallthru
        _
      %p2637 = scmp.le.s32.totalorder 2, %s21
      // Predicated region
      $region57: #{tpu_custom_call.1} parent=5 // pred_check
        %p2638 = pneg %p2637
      $region58: #{tpu_custom_call.1} parent=5 // pred_check_branch
        %2640 = sbr.rel (%p2638) target = $region60
      $region59: #{tpu_custom_call.1} parent=5 // pred_region
        %s2641 = ssub.s32 %s21, 2
        // Predicated region
        $region61: #{tpu_custom_call.1} parent=59 // pred_check
          %p2642 = pneg %p138
        $region62: #{tpu_custom_call.1} parent=59 // pred_check_branch
          %2644 = sbr.rel (%p2642) target = $region64
        $region63: #{tpu_custom_call.1} parent=59 // pred_region
          %s2645 = sand.u32 %s123, 1
          %s2646 = scalar_lea.sflag [#allocation5], %s2645
          %s2647 = sand.u32 %s123, 1
          %s2648 = smul.addr %s2647, 256
          %s2649 = scalar_lea.vmem [#allocation8], %s2648
          %2650 = dma.done %s2646, 4096
        $region64: #{tpu_custom_call.1} parent=59 // pred_fallthru
          _
        // Predicated region
        $region65: #{tpu_custom_call.1} parent=59 // pred_check
          %p2651 = pneg %p166
        $region66: #{tpu_custom_call.1} parent=59 // pred_check_branch
          %2653 = sbr.rel (%p2651) target = $region68
        $region67: #{tpu_custom_call.1} parent=59 // pred_region
          %s2654 = sand.u32 %s27, 1
          %s2655 = scalar_lea.sflag [#allocation10], %s2654
          %s2656 = sand.u32 %s151, 1
          %s2657 = smul.addr %s2656, 8
          %s2658 = scalar_lea.vmem [#allocation9], %s2657
          %2659 = dma.done %s2655, 128
        $region68: #{tpu_custom_call.1} parent=59 // pred_fallthru
          _
        // Predicated region
        $region69: #{tpu_custom_call.1} parent=59 // pred_check
          %p2660 = pneg %p194
        $region70: #{tpu_custom_call.1} parent=59 // pred_check_branch
          %2662 = sbr.rel (%p2660) target = $region72
        $region71: #{tpu_custom_call.1} parent=59 // pred_region
          %s2663 = sand.u32 %s27, 1
          %s2664 = scalar_lea.sflag [#allocation10], %s2663
          %s2665 = sand.u32 %s179, 1
          %s2666 = smul.addr %s2665, 8
          %s2667 = scalar_lea.vmem [#allocation11], %s2666
          %2668 = dma.done %s2664, 128
        $region72: #{tpu_custom_call.1} parent=59 // pred_fallthru
          _
      $region60: #{tpu_custom_call.1} parent=5 // pred_fallthru
        _
    $region6: #{tpu_custom_call.1} parent=1 // loop_footer
      %s25 = sadd.s32 1, %s21
    $region7: #{tpu_custom_call.1} parent=1 // loop_footer_branch
      %20 = sbr.rel target = $region3
    $region8: #{tpu_custom_call.1} parent=1 // loop_exit
      _
    %2669 = vsyncpa [#allocation4], 1
    %s2670 = scalar_lea.sflag [#allocation4], 1
    %2671 = vsyncpa %s2670, 1
    %2672 = vsyncpa [#allocation7], 1
    %2673 = vsyncpa [#allocation5], 1
    %s2674 = scalar_lea.sflag [#allocation5], 1
    %2675 = vsyncpa %s2674, 1
    %2676 = vsyncpa [#allocation10], 1
    %s2677 = scalar_lea.sflag [#allocation10], 1
    %2678 = vsyncpa %s2677, 1

</llo_original>
